<compile_context>
chip_gen: v6e
topology: v6e:2x2x1
jax: 0.10.0
libtpu: 0.0.40
codegen_flags: <defaults>
</compile_context>

<pallas_src>
import functools

import jax
import jax.numpy as jnp
import numpy as np
from jax import lax
from jax.experimental import pallas as pl
from jax.experimental.pallas import tpu as pltpu


def _round_up(x, m):
    return (x + m - 1) // m * m


# ------------------------------ fused encoder kernel ------------------------------
def _encoder_kernel(x_ref, w_ref, b_ref, s_ref, o_ref, act_ref, col_ref, *,
                    H, W, K, p, pool, Ho, Wo, Cin, Cout, Cmax, depth,
                    Bblk, SEG, G):
    # x_ref  : (Bblk, Cin, H*W)         input, channels on sublanes, spatial on lanes
    # w_ref  : (depth, Cout, K*K*Cmax)  flattened per-layer weights (im2col row order)
    # b_ref  : (depth, Cout, 1)         per-layer bias
    # s_ref  : (H*W, Ho*Wo)             0/1 pooling anchor-selection matrix
    # o_ref  : (Cout, Bblk*Ho*Wo)       pooled output (lane-dense, last dim = 128)
    # act_ref: (Cmax, Bblk*SEG)  VMEM   resident activation, flattened spatial on lanes,
    #                                   zero guard zones (>= max(p,pool-1)*(W+1) lanes)
    #                                   around each batch segment (serve as both halos)
    # col_ref: (K*K*Cmax, Bblk*H*W) VMEM  im2col staging (contraction rows on sublanes)
    HW = H * W
    OHW = Ho * Wo

    # --- zero the resident activation (guard zones stay zero forever), load the input ---
    act_ref[...] = jnp.zeros((Cmax, Bblk * SEG), jnp.float32)
    for b in range(Bblk):
        s0 = b * SEG + G                                  # 128-aligned interior start
        act_ref[0:Cin, s0:s0 + HW] = x_ref[b]

    # --- static horizontal-halo masks (depend only on kw), built once from a 2D iota ---
    w_coord = lax.broadcasted_iota(jnp.int32, (1, HW), 1) % W
    halo_mask = {}
    for kw in range(K):
        off = kw - p
        if off != 0:
            halo_mask[kw] = jnp.logical_and(w_coord + off >= 0, w_coord + off < W)

    # --- depth x (shifted-slab im2col -> one deep GEMM -> bias -> ReLU), VMEM-resident ---
    # depth/K/pool are tiny & static -> unrolled Python loops (fori_loop if they grow).
    for l in range(depth):
        for kh in range(K):
            for kw in range(K):
                t = kh * K + kw
                d = (kh - p) * W + (kw - p)               # lane shift for this tap
                for b in range(Bblk):
                    s0 = b * SEG + G + d
                    slab = act_ref[:, s0:s0 + HW]         # (Cmax, HW) shifted read
                    if kw != p:                           # zero the horizontal halo lanes
                        slab = jnp.where(halo_mask[kw], slab, 0.0)
                    col_ref[t * Cmax:(t + 1) * Cmax, b * HW:(b + 1) * HW] = slab
        y = jnp.dot(w_ref[l], col_ref[...],               # (Cout,KKC) @ (KKC, Bblk*HW)
                    preferred_element_type=jnp.float32)
        y = jnp.maximum(y + b_ref[l], 0.0)                # bias + ReLU, full lane width
        for b in range(Bblk):                             # write-back, guards untouched
            s0 = b * SEG + G
            act_ref[0:Cout, s0:s0 + HW] = y[:, b * HW:(b + 1) * HW]
        # If Cout < Cin, rows [Cout, Cmax) keep stale layer-0 data; harmless because the
        # matching weight columns are zero-padded (same behaviour as the reference).

    # --- MaxPool2d: max of pool*pool lane-shifted slabs, then MXU lane compaction ---
    for b in range(Bblk):
        base = b * SEG + G
        m = None
        for ph in range(pool):
            for pw in range(pool):
                d = ph * W + pw
                v = act_ref[0:Cout, base + d:base + d + HW]   # (Cout, HW)
                m = v if m is None else jnp.maximum(m, v)
        # m[:, n] = window max anchored at flat position n; keep only the anchor lanes
        # (h % pool == 0, w % pool == 0) and compact them to (Cout, Ho*Wo) on the MXU.
        pooled = jnp.dot(m, s_ref[...], preferred_element_type=jnp.float32)
        o_ref[:, b * OHW:(b + 1) * OHW] = pooled


# --------------------------------- host-side helpers --------------------------------
def _prep_weights(params, K, Cin, Cout, depth):
    """PyTorch OIHW weights -> (depth, Cout, K*K*Cmax) matching the in-kernel im2col row
    order (kh*K + kw)*Cmax + c, zero-padded along input channels."""
    Cmax = max(Cin, Cout)
    w_list, b_list = [], []
    for i, (w, b) in enumerate(params):
        cin_l = Cin if i == 0 else Cout
        w_pad = jnp.zeros((Cout, Cmax, K, K), jnp.float32).at[:, :cin_l].set(
            w.astype(jnp.float32))
        w_flat = jnp.transpose(w_pad, (0, 2, 3, 1)).reshape(Cout, K * K * Cmax)
        w_list.append(w_flat)
        b_list.append(b.astype(jnp.float32).reshape(Cout, 1))
    return jnp.stack(w_list), jnp.stack(b_list)


def _pool_select_matrix(H, W, pool):
    """0/1 matrix S (H*W, Ho*Wo): S[n, j] = 1 iff flat position n is the top-left anchor
    of pooling window j (used to compact pooled lanes with one MXU matmul)."""
    Ho, Wo = H // pool, W // pool
    S = np.zeros((H * W, Ho * Wo), np.float32)
    for oh in range(Ho):
        for ow in range(Wo):
            S[(pool * oh) * W + pool * ow, oh * Wo + ow] = 1.0
    return jnp.asarray(S)


def encoder_forward(params, img_nchw, kernel_size, pool_size, *, batch_blocks=1):
    """img_nchw: (B, Cin, H, W) -> (B, Cout, H//pool, W//pool), like the PyTorch module.
    batch_blocks: grid steps the batch is split into (1 is best on single-core v5e/v6e;
    use 2 on v7x so the 'parallel' axis is sharded across both TensorCores)."""
    B, Cin, H, W = img_nchw.shape
    Cout = params[0][0].shape[0]
    depth = len(params)
    K, pool = kernel_size, pool_size
    assert K % 2 == 1, "padding=K//2 keeps the resolution only for odd kernel sizes"
    assert B % batch_blocks == 0
    p = K // 2
    Ho, Wo = H // pool, W // pool
    Cmax = max(Cin, Cout)
    Bblk = B // batch_blocks
    HW, OHW, KKC = H * W, Ho * Wo, K * K * Cmax

    # guard-zone size covers the widest shifted read (conv taps or pool windows)
    guard = max(p, pool - 1) * (W + 1)
    G = _round_up(guard, 128)                   # left guard -> 128-aligned interior start
    SEG = G + _round_up(HW + guard, 128)        # per-batch segment length (128-aligned)

    # interface glue only (tiny): flatten spatial, flatten/pad parameters
    x = img_nchw.reshape(B, Cin, HW).astype(jnp.float32)
    w_all, b_all = _prep_weights(params, K, Cin, Cout, depth)
    sel = _pool_select_matrix(H, W, pool)

    kernel = functools.partial(
        _encoder_kernel, H=H, W=W, K=K, p=p, pool=pool, Ho=Ho, Wo=Wo,
        Cin=Cin, Cout=Cout, Cmax=Cmax, depth=depth, Bblk=Bblk, SEG=SEG, G=G)

    out = pl.pallas_call(
        kernel,
        out_shape=jax.ShapeDtypeStruct((batch_blocks * Cout, Bblk * OHW), jnp.float32),
        grid=(batch_blocks,),
        in_specs=[
            pl.BlockSpec((Bblk, Cin, HW), lambda i: (i, 0, 0)),
            pl.BlockSpec((depth, Cout, KKC), lambda i: (0, 0, 0)),
            pl.BlockSpec((depth, Cout, 1), lambda i: (0, 0, 0)),
            pl.BlockSpec((HW, OHW), lambda i: (0, 0)),
        ],
        out_specs=pl.BlockSpec((Cout, Bblk * OHW), lambda i: (i, 0)),
        scratch_shapes=[
            pltpu.VMEM((Cmax, Bblk * SEG), jnp.float32),    # resident activation
            pltpu.VMEM((KKC, Bblk * HW), jnp.float32),      # im2col staging
        ],
        compiler_params=pltpu.CompilerParams(
            dimension_semantics=("parallel",)),             # megacore split on v7x
    )(x, w_all, b_all, sel)

    # (batch_blocks*Cout, Bblk*Ho*Wo) -> (B, Cout, Ho, Wo)   (tiny host-side glue)
    out = out.reshape(batch_blocks, Cout, Bblk, Ho, Wo)
    return jnp.transpose(out, (0, 2, 1, 3, 4)).reshape(B, Cout, Ho, Wo)


# ------------------------------ params / reference check -----------------------------
def init_encoder_params(key, in_channels, out_channels, depth, kernel_size):
    """Deterministic, PyTorch-shaped (OIHW weights, (Cout,) bias) parameters."""
    params = []
    for i in range(depth):
        cin = in_channels if i == 0 else out_channels
        key, kw, kb = jax.random.split(key, 3)
        fan_in = cin * kernel_size * kernel_size
        bound = 1.0 / np.sqrt(fan_in)
        w = jax.random.uniform(kw, (out_channels, cin, kernel_size, kernel_size),
                               jnp.float32, -bound, bound)
        b = jax.random.uniform(kb, (out_channels,), jnp.float32, -bound, bound)
        params.append((w, b))
    return params


def reference_forward(params, img_nchw, kernel_size, pool_size):
    x = img_nchw
    pad = kernel_size // 2
    for (w, b) in params:
        x = jax.lax.conv_general_dilated(
            x, w, window_strides=(1, 1), padding=[(pad, pad), (pad, pad)],
            dimension_numbers=('NCHW', 'OIHW', 'NCHW'))
        x = jnp.maximum(x + b[None, :, None, None], 0.0)
    x = jax.lax.reduce_window(x, -jnp.inf, jax.lax.max,
                              (1, 1, pool_size, pool_size),
                              (1, 1, pool_size, pool_size), 'VALID')
    return x


if __name__ == "__main__":
    B, Cin, Cout, H, W = 2, 4, 8, 16, 16
    depth, K, pool = 2, 3, 2

    key = jax.random.PRNGKey(0)
    key, kimg = jax.random.split(key)
    img = jax.random.normal(kimg, (B, Cin, H, W), jnp.float32)
    params = init_encoder_params(key, Cin, Cout, depth, K)

    out = encoder_forward(params, img, K, pool)
    out = jax.block_until_ready(out)

    assert out.shape == (B, Cout, H // pool, W // pool), out.shape
    ref = reference_forward(params, img, K, pool)
    np.testing.assert_allclose(np.asarray(out), np.asarray(ref),
                               rtol=1e-4, atol=1e-4)
    print("KERNEL_OK")
</pallas_src>

<mosaic_0001>
module attributes {stable_mosaic.version = 11 : i64} {
  func.func @_encoder_kernel(%arg0: i32, %arg1: memref<2x4x256xf32, #tpu.memory_space<vmem>>, %arg2: memref<2x8x72xf32, #tpu.memory_space<vmem>>, %arg3: memref<2x8x1xf32, #tpu.memory_space<vmem>>, %arg4: memref<256x64xf32, #tpu.memory_space<vmem>>, %arg5: memref<8x128xf32, #tpu.memory_space<vmem>>, %arg6: memref<8x1024xf32, #tpu.memory_space<vmem>>, %arg7: memref<72x512xf32, #tpu.memory_space<vmem>>) attributes {dimension_semantics = [#tpu.dimension_semantics<parallel>], iteration_bounds = array<i64: 1>, scalar_prefetch = 0 : i64, scratch_operands = 2 : i64, tpu.core_type = #tpu.core_type<tc>, window_params = [{transform_indices = @transform_0, window_bounds = array<i64: 2, 4, 256>}, {pipeline_mode = #tpu.pipeline_mode<synchronous>, transform_indices = @transform_1, window_bounds = array<i64: 2, 8, 72>}, {pipeline_mode = #tpu.pipeline_mode<synchronous>, transform_indices = @transform_2, window_bounds = array<i64: 2, 8, 1>}, {pipeline_mode = #tpu.pipeline_mode<synchronous>, transform_indices = @transform_3, window_bounds = array<i64: 256, 64>}, {transform_indices = @transform_4, window_bounds = array<i64: 8, 128>}]} {
    %cst = arith.constant 0.000000e+00 : f32
    %0 = vector.broadcast %cst : f32 to vector<8x1024xf32>
    %c0 = arith.constant 0 : index
    %c0_0 = arith.constant 0 : index
    %1 = vector.load %arg6[%c0, %c0_0] : memref<8x1024xf32, #tpu.memory_space<vmem>>, vector<8x1024xf32>
    tpu.vector_store %arg6[%c0, %c0_0], %0 {strides = array<i32>} : memref<8x1024xf32, #tpu.memory_space<vmem>>, vector<8x1024xf32>,
    %c0_1 = arith.constant 0 : index
    %c0_2 = arith.constant 0 : index
    %c0_3 = arith.constant 0 : index
    %2 = vector.load %arg1[%c0_1, %c0_2, %c0_3] : memref<2x4x256xf32, #tpu.memory_space<vmem>>, vector<1x4x256xf32>
    %3 = vector.shape_cast %2 : vector<1x4x256xf32> to vector<4x256xf32>
    %c0_4 = arith.constant 0 : index
    %c128 = arith.constant 128 : index
    %4 = vector.load %arg6[%c0_4, %c128] : memref<8x1024xf32, #tpu.memory_space<vmem>>, vector<4x256xf32>
    tpu.vector_store %arg6[%c0_4, %c128], %3 {strides = array<i32>} : memref<8x1024xf32, #tpu.memory_space<vmem>>, vector<4x256xf32>,
    %c1 = arith.constant 1 : index
    %c0_5 = arith.constant 0 : index
    %c0_6 = arith.constant 0 : index
    %5 = vector.load %arg1[%c1, %c0_5, %c0_6] : memref<2x4x256xf32, #tpu.memory_space<vmem>>, vector<1x4x256xf32>
    %6 = vector.shape_cast %5 : vector<1x4x256xf32> to vector<4x256xf32>
    %c0_7 = arith.constant 0 : index
    %c640 = arith.constant 640 : index
    %7 = vector.load %arg6[%c0_7, %c640] : memref<8x1024xf32, #tpu.memory_space<vmem>>, vector<4x256xf32>
    tpu.vector_store %arg6[%c0_7, %c640], %6 {strides = array<i32>} : memref<8x1024xf32, #tpu.memory_space<vmem>>, vector<4x256xf32>,
    %8 = tpu.iota {dimensions = array<i32: 1>} : vector<1x256xi32>
    %c16_i32 = arith.constant 16 : i32
    %c0_i32 = arith.constant 0 : i32
    %9 = arith.cmpi eq, %c16_i32, %c0_i32 : i32
    %c1_i32 = arith.constant 1 : i32
    %10 = arith.select %9, %c1_i32, %c16_i32 : i32
    %11 = vector.broadcast %10 : i32 to vector<1x256xi32>
    %12 = arith.remsi %8, %11 : vector<1x256xi32>
    %c0_i32_8 = arith.constant 0 : i32
    %13 = vector.broadcast %c0_i32_8 : i32 to vector<1x256xi32>
    %14 = arith.cmpi ne, %12, %13 : vector<1x256xi32>
    %c0_i32_9 = arith.constant 0 : i32
    %15 = vector.broadcast %c0_i32_9 : i32 to vector<1x256xi32>
    %16 = arith.cmpi slt, %12, %15 : vector<1x256xi32>
    %c0_i32_10 = arith.constant 0 : i32
    %17 = arith.cmpi slt, %10, %c0_i32_10 : i32
    %18 = vector.broadcast %17 : i1 to vector<1x256xi1>
    %19 = vector.broadcast %18 : vector<1x256xi1> to vector<1x256xi1>
    %20 = arith.xori %16, %19 : vector<1x256xi1>
    %21 = arith.andi %20, %14 : vector<1x256xi1>
    %22 = vector.broadcast %10 : i32 to vector<1x256xi32>
    %23 = arith.addi %12, %22 : vector<1x256xi32>
    %24 = arith.select %21, %23, %12 : vector<1x256xi1>, vector<1x256xi32>
    %c-1_i32 = arith.constant -1 : i32
    %25 = vector.broadcast %c-1_i32 : i32 to vector<1x256xi32>
    %26 = arith.addi %24, %25 : vector<1x256xi32>
    %c0_i32_11 = arith.constant 0 : i32
    %27 = vector.broadcast %c0_i32_11 : i32 to vector<1x256xi32>
    %28 = arith.cmpi sge, %26, %27 : vector<1x256xi32>
    %c-1_i32_12 = arith.constant -1 : i32
    %29 = vector.broadcast %c-1_i32_12 : i32 to vector<1x256xi32>
    %30 = arith.addi %24, %29 : vector<1x256xi32>
    %c16_i32_13 = arith.constant 16 : i32
    %31 = vector.broadcast %c16_i32_13 : i32 to vector<1x256xi32>
    %32 = arith.cmpi slt, %30, %31 : vector<1x256xi32>
    %33 = arith.andi %28, %32 : vector<1x256xi1>
    %c1_i32_14 = arith.constant 1 : i32
    %34 = vector.broadcast %c1_i32_14 : i32 to vector<1x256xi32>
    %35 = arith.addi %24, %34 : vector<1x256xi32>
    %c0_i32_15 = arith.constant 0 : i32
    %36 = vector.broadcast %c0_i32_15 : i32 to vector<1x256xi32>
    %37 = arith.cmpi sge, %35, %36 : vector<1x256xi32>
    %c1_i32_16 = arith.constant 1 : i32
    %38 = vector.broadcast %c1_i32_16 : i32 to vector<1x256xi32>
    %39 = arith.addi %24, %38 : vector<1x256xi32>
    %c16_i32_17 = arith.constant 16 : i32
    %40 = vector.broadcast %c16_i32_17 : i32 to vector<1x256xi32>
    %41 = arith.cmpi slt, %39, %40 : vector<1x256xi32>
    %42 = arith.andi %37, %41 : vector<1x256xi1>
    %c0_18 = arith.constant 0 : index
    %c111 = arith.constant 111 : index
    %43 = vector.load %arg6[%c0_18, %c111] : memref<8x1024xf32, #tpu.memory_space<vmem>>, vector<8x256xf32>
    %cst_19 = arith.constant 0.000000e+00 : f32
    %44 = vector.shape_cast %33 : vector<1x256xi1> to vector<1x256xi1>
    %45 = vector.broadcast %44 : vector<1x256xi1> to vector<8x256xi1>
    %46 = vector.broadcast %cst_19 : f32 to vector<8x256xf32>
    %47 = arith.select %45, %43, %46 : vector<8x256xi1>, vector<8x256xf32>
    %c0_20 = arith.constant 0 : index
    %c0_21 = arith.constant 0 : index
    %48 = vector.load %arg7[%c0_20, %c0_21] : memref<72x512xf32, #tpu.memory_space<vmem>>, vector<8x256xf32>
    tpu.vector_store %arg7[%c0_20, %c0_21], %47 {strides = array<i32>} : memref<72x512xf32, #tpu.memory_space<vmem>>, vector<8x256xf32>,
    %c0_22 = arith.constant 0 : index
    %c623 = arith.constant 623 : index
    %49 = vector.load %arg6[%c0_22, %c623] : memref<8x1024xf32, #tpu.memory_space<vmem>>, vector<8x256xf32>
    %cst_23 = arith.constant 0.000000e+00 : f32
    %50 = vector.shape_cast %33 : vector<1x256xi1> to vector<1x256xi1>
    %51 = vector.broadcast %50 : vector<1x256xi1> to vector<8x256xi1>
    %52 = vector.broadcast %cst_23 : f32 to vector<8x256xf32>
    %53 = arith.select %51, %49, %52 : vector<8x256xi1>, vector<8x256xf32>
    %c0_24 = arith.constant 0 : index
    %c256 = arith.constant 256 : index
    %54 = vector.load %arg7[%c0_24, %c256] : memref<72x512xf32, #tpu.memory_space<vmem>>, vector<8x256xf32>
    tpu.vector_store %arg7[%c0_24, %c256], %53 {strides = array<i32>} : memref<72x512xf32, #tpu.memory_space<vmem>>, vector<8x256xf32>,
    %c0_25 = arith.constant 0 : index
    %c112 = arith.constant 112 : index
    %55 = vector.load %arg6[%c0_25, %c112] : memref<8x1024xf32, #tpu.memory_space<vmem>>, vector<8x256xf32>
    %c8 = arith.constant 8 : index
    %c0_26 = arith.constant 0 : index
    %56 = vector.load %arg7[%c8, %c0_26] : memref<72x512xf32, #tpu.memory_space<vmem>>, vector<8x256xf32>
    tpu.vector_store %arg7[%c8, %c0_26], %55 {strides = array<i32>} : memref<72x512xf32, #tpu.memory_space<vmem>>, vector<8x256xf32>,
    %c0_27 = arith.constant 0 : index
    %c624 = arith.constant 624 : index
    %57 = vector.load %arg6[%c0_27, %c624] : memref<8x1024xf32, #tpu.memory_space<vmem>>, vector<8x256xf32>
    %c8_28 = arith.constant 8 : index
    %c256_29 = arith.constant 256 : index
    %58 = vector.load %arg7[%c8_28, %c256_29] : memref<72x512xf32, #tpu.memory_space<vmem>>, vector<8x256xf32>
    tpu.vector_store %arg7[%c8_28, %c256_29], %57 {strides = array<i32>} : memref<72x512xf32, #tpu.memory_space<vmem>>, vector<8x256xf32>,
    %c0_30 = arith.constant 0 : index
    %c113 = arith.constant 113 : index
    %59 = vector.load %arg6[%c0_30, %c113] : memref<8x1024xf32, #tpu.memory_space<vmem>>, vector<8x256xf32>
    %cst_31 = arith.constant 0.000000e+00 : f32
    %60 = vector.shape_cast %42 : vector<1x256xi1> to vector<1x256xi1>
    %61 = vector.broadcast %60 : vector<1x256xi1> to vector<8x256xi1>
    %62 = vector.broadcast %cst_31 : f32 to vector<8x256xf32>
    %63 = arith.select %61, %59, %62 : vector<8x256xi1>, vector<8x256xf32>
    %c16 = arith.constant 16 : index
    %c0_32 = arith.constant 0 : index
    %64 = vector.load %arg7[%c16, %c0_32] : memref<72x512xf32, #tpu.memory_space<vmem>>, vector<8x256xf32>
    tpu.vector_store %arg7[%c16, %c0_32], %63 {strides = array<i32>} : memref<72x512xf32, #tpu.memory_space<vmem>>, vector<8x256xf32>,
    %c0_33 = arith.constant 0 : index
    %c625 = arith.constant 625 : index
    %65 = vector.load %arg6[%c0_33, %c625] : memref<8x1024xf32, #tpu.memory_space<vmem>>, vector<8x256xf32>
    %cst_34 = arith.constant 0.000000e+00 : f32
    %66 = vector.shape_cast %42 : vector<1x256xi1> to vector<1x256xi1>
    %67 = vector.broadcast %66 : vector<1x256xi1> to vector<8x256xi1>
    %68 = vector.broadcast %cst_34 : f32 to vector<8x256xf32>
    %69 = arith.select %67, %65, %68 : vector<8x256xi1>, vector<8x256xf32>
    %c16_35 = arith.constant 16 : index
    %c256_36 = arith.constant 256 : index
    %70 = vector.load %arg7[%c16_35, %c256_36] : memref<72x512xf32, #tpu.memory_space<vmem>>, vector<8x256xf32>
    tpu.vector_store %arg7[%c16_35, %c256_36], %69 {strides = array<i32>} : memref<72x512xf32, #tpu.memory_space<vmem>>, vector<8x256xf32>,
    %c0_37 = arith.constant 0 : index
    %c127 = arith.constant 127 : index
    %71 = vector.load %arg6[%c0_37, %c127] : memref<8x1024xf32, #tpu.memory_space<vmem>>, vector<8x256xf32>
    %cst_38 = arith.constant 0.000000e+00 : f32
    %72 = vector.shape_cast %33 : vector<1x256xi1> to vector<1x256xi1>
    %73 = vector.broadcast %72 : vector<1x256xi1> to vector<8x256xi1>
    %74 = vector.broadcast %cst_38 : f32 to vector<8x256xf32>
    %75 = arith.select %73, %71, %74 : vector<8x256xi1>, vector<8x256xf32>
    %c24 = arith.constant 24 : index
    %c0_39 = arith.constant 0 : index
    %76 = vector.load %arg7[%c24, %c0_39] : memref<72x512xf32, #tpu.memory_space<vmem>>, vector<8x256xf32>
    tpu.vector_store %arg7[%c24, %c0_39], %75 {strides = array<i32>} : memref<72x512xf32, #tpu.memory_space<vmem>>, vector<8x256xf32>,
    %c0_40 = arith.constant 0 : index
    %c639 = arith.constant 639 : index
    %77 = vector.load %arg6[%c0_40, %c639] : memref<8x1024xf32, #tpu.memory_space<vmem>>, vector<8x256xf32>
    %cst_41 = arith.constant 0.000000e+00 : f32
    %78 = vector.shape_cast %33 : vector<1x256xi1> to vector<1x256xi1>
    %79 = vector.broadcast %78 : vector<1x256xi1> to vector<8x256xi1>
    %80 = vector.broadcast %cst_41 : f32 to vector<8x256xf32>
    %81 = arith.select %79, %77, %80 : vector<8x256xi1>, vector<8x256xf32>
    %c24_42 = arith.constant 24 : index
    %c256_43 = arith.constant 256 : index
    %82 = vector.load %arg7[%c24_42, %c256_43] : memref<72x512xf32, #tpu.memory_space<vmem>>, vector<8x256xf32>
    tpu.vector_store %arg7[%c24_42, %c256_43], %81 {strides = array<i32>} : memref<72x512xf32, #tpu.memory_space<vmem>>, vector<8x256xf32>,
    %c0_44 = arith.constant 0 : index
    %c128_45 = arith.constant 128 : index
    %83 = vector.load %arg6[%c0_44, %c128_45] : memref<8x1024xf32, #tpu.memory_space<vmem>>, vector<8x256xf32>
    %c32 = arith.constant 32 : index
    %c0_46 = arith.constant 0 : index
    %84 = vector.load %arg7[%c32, %c0_46] : memref<72x512xf32, #tpu.memory_space<vmem>>, vector<8x256xf32>
    tpu.vector_store %arg7[%c32, %c0_46], %83 {strides = array<i32>} : memref<72x512xf32, #tpu.memory_space<vmem>>, vector<8x256xf32>,
    %c0_47 = arith.constant 0 : index
    %c640_48 = arith.constant 640 : index
    %85 = vector.load %arg6[%c0_47, %c640_48] : memref<8x1024xf32, #tpu.memory_space<vmem>>, vector<8x256xf32>
    %c32_49 = arith.constant 32 : index
    %c256_50 = arith.constant 256 : index
    %86 = vector.load %arg7[%c32_49, %c256_50] : memref<72x512xf32, #tpu.memory_space<vmem>>, vector<8x256xf32>
    tpu.vector_store %arg7[%c32_49, %c256_50], %85 {strides = array<i32>} : memref<72x512xf32, #tpu.memory_space<vmem>>, vector<8x256xf32>,
    %c0_51 = arith.constant 0 : index
    %c129 = arith.constant 129 : index
    %87 = vector.load %arg6[%c0_51, %c129] : memref<8x1024xf32, #tpu.memory_space<vmem>>, vector<8x256xf32>
    %cst_52 = arith.constant 0.000000e+00 : f32
    %88 = vector.shape_cast %42 : vector<1x256xi1> to vector<1x256xi1>
    %89 = vector.broadcast %88 : vector<1x256xi1> to vector<8x256xi1>
    %90 = vector.broadcast %cst_52 : f32 to vector<8x256xf32>
    %91 = arith.select %89, %87, %90 : vector<8x256xi1>, vector<8x256xf32>
    %c40 = arith.constant 40 : index
    %c0_53 = arith.constant 0 : index
    %92 = vector.load %arg7[%c40, %c0_53] : memref<72x512xf32, #tpu.memory_space<vmem>>, vector<8x256xf32>
    tpu.vector_store %arg7[%c40, %c0_53], %91 {strides = array<i32>} : memref<72x512xf32, #tpu.memory_space<vmem>>, vector<8x256xf32>,
    %c0_54 = arith.constant 0 : index
    %c641 = arith.constant 641 : index
    %93 = vector.load %arg6[%c0_54, %c641] : memref<8x1024xf32, #tpu.memory_space<vmem>>, vector<8x256xf32>
    %cst_55 = arith.constant 0.000000e+00 : f32
    %94 = vector.shape_cast %42 : vector<1x256xi1> to vector<1x256xi1>
    %95 = vector.broadcast %94 : vector<1x256xi1> to vector<8x256xi1>
    %96 = vector.broadcast %cst_55 : f32 to vector<8x256xf32>
    %97 = arith.select %95, %93, %96 : vector<8x256xi1>, vector<8x256xf32>
    %c40_56 = arith.constant 40 : index
    %c256_57 = arith.constant 256 : index
    %98 = vector.load %arg7[%c40_56, %c256_57] : memref<72x512xf32, #tpu.memory_space<vmem>>, vector<8x256xf32>
    tpu.vector_store %arg7[%c40_56, %c256_57], %97 {strides = array<i32>} : memref<72x512xf32, #tpu.memory_space<vmem>>, vector<8x256xf32>,
    %c0_58 = arith.constant 0 : index
    %c143 = arith.constant 143 : index
    %99 = vector.load %arg6[%c0_58, %c143] : memref<8x1024xf32, #tpu.memory_space<vmem>>, vector<8x256xf32>
    %cst_59 = arith.constant 0.000000e+00 : f32
    %100 = vector.shape_cast %33 : vector<1x256xi1> to vector<1x256xi1>
    %101 = vector.broadcast %100 : vector<1x256xi1> to vector<8x256xi1>
    %102 = vector.broadcast %cst_59 : f32 to vector<8x256xf32>
    %103 = arith.select %101, %99, %102 : vector<8x256xi1>, vector<8x256xf32>
    %c48 = arith.constant 48 : index
    %c0_60 = arith.constant 0 : index
    %104 = vector.load %arg7[%c48, %c0_60] : memref<72x512xf32, #tpu.memory_space<vmem>>, vector<8x256xf32>
    tpu.vector_store %arg7[%c48, %c0_60], %103 {strides = array<i32>} : memref<72x512xf32, #tpu.memory_space<vmem>>, vector<8x256xf32>,
    %c0_61 = arith.constant 0 : index
    %c655 = arith.constant 655 : index
    %105 = vector.load %arg6[%c0_61, %c655] : memref<8x1024xf32, #tpu.memory_space<vmem>>, vector<8x256xf32>
    %cst_62 = arith.constant 0.000000e+00 : f32
    %106 = vector.shape_cast %33 : vector<1x256xi1> to vector<1x256xi1>
    %107 = vector.broadcast %106 : vector<1x256xi1> to vector<8x256xi1>
    %108 = vector.broadcast %cst_62 : f32 to vector<8x256xf32>
    %109 = arith.select %107, %105, %108 : vector<8x256xi1>, vector<8x256xf32>
    %c48_63 = arith.constant 48 : index
    %c256_64 = arith.constant 256 : index
    %110 = vector.load %arg7[%c48_63, %c256_64] : memref<72x512xf32, #tpu.memory_space<vmem>>, vector<8x256xf32>
    tpu.vector_store %arg7[%c48_63, %c256_64], %109 {strides = array<i32>} : memref<72x512xf32, #tpu.memory_space<vmem>>, vector<8x256xf32>,
    %c0_65 = arith.constant 0 : index
    %c144 = arith.constant 144 : index
    %111 = vector.load %arg6[%c0_65, %c144] : memref<8x1024xf32, #tpu.memory_space<vmem>>, vector<8x256xf32>
    %c56 = arith.constant 56 : index
    %c0_66 = arith.constant 0 : index
    %112 = vector.load %arg7[%c56, %c0_66] : memref<72x512xf32, #tpu.memory_space<vmem>>, vector<8x256xf32>
    tpu.vector_store %arg7[%c56, %c0_66], %111 {strides = array<i32>} : memref<72x512xf32, #tpu.memory_space<vmem>>, vector<8x256xf32>,
    %c0_67 = arith.constant 0 : index
    %c656 = arith.constant 656 : index
    %113 = vector.load %arg6[%c0_67, %c656] : memref<8x1024xf32, #tpu.memory_space<vmem>>, vector<8x256xf32>
    %c56_68 = arith.constant 56 : index
    %c256_69 = arith.constant 256 : index
    %114 = vector.load %arg7[%c56_68, %c256_69] : memref<72x512xf32, #tpu.memory_space<vmem>>, vector<8x256xf32>
    tpu.vector_store %arg7[%c56_68, %c256_69], %113 {strides = array<i32>} : memref<72x512xf32, #tpu.memory_space<vmem>>, vector<8x256xf32>,
    %c0_70 = arith.constant 0 : index
    %c145 = arith.constant 145 : index
    %115 = vector.load %arg6[%c0_70, %c145] : memref<8x1024xf32, #tpu.memory_space<vmem>>, vector<8x256xf32>
    %cst_71 = arith.constant 0.000000e+00 : f32
    %116 = vector.shape_cast %42 : vector<1x256xi1> to vector<1x256xi1>
    %117 = vector.broadcast %116 : vector<1x256xi1> to vector<8x256xi1>
    %118 = vector.broadcast %cst_71 : f32 to vector<8x256xf32>
    %119 = arith.select %117, %115, %118 : vector<8x256xi1>, vector<8x256xf32>
    %c64 = arith.constant 64 : index
    %c0_72 = arith.constant 0 : index
    %120 = vector.load %arg7[%c64, %c0_72] : memref<72x512xf32, #tpu.memory_space<vmem>>, vector<8x256xf32>
    tpu.vector_store %arg7[%c64, %c0_72], %119 {strides = array<i32>} : memref<72x512xf32, #tpu.memory_space<vmem>>, vector<8x256xf32>,
    %c0_73 = arith.constant 0 : index
    %c657 = arith.constant 657 : index
    %121 = vector.load %arg6[%c0_73, %c657] : memref<8x1024xf32, #tpu.memory_space<vmem>>, vector<8x256xf32>
    %cst_74 = arith.constant 0.000000e+00 : f32
    %122 = vector.shape_cast %42 : vector<1x256xi1> to vector<1x256xi1>
    %123 = vector.broadcast %122 : vector<1x256xi1> to vector<8x256xi1>
    %124 = vector.broadcast %cst_74 : f32 to vector<8x256xf32>
    %125 = arith.select %123, %121, %124 : vector<8x256xi1>, vector<8x256xf32>
    %c64_75 = arith.constant 64 : index
    %c256_76 = arith.constant 256 : index
    %126 = vector.load %arg7[%c64_75, %c256_76] : memref<72x512xf32, #tpu.memory_space<vmem>>, vector<8x256xf32>
    tpu.vector_store %arg7[%c64_75, %c256_76], %125 {strides = array<i32>} : memref<72x512xf32, #tpu.memory_space<vmem>>, vector<8x256xf32>,
    %c0_77 = arith.constant 0 : index
    %c0_78 = arith.constant 0 : index
    %c0_79 = arith.constant 0 : index
    %127 = vector.load %arg2[%c0_77, %c0_78, %c0_79] : memref<2x8x72xf32, #tpu.memory_space<vmem>>, vector<1x8x72xf32>
    %128 = vector.shape_cast %127 : vector<1x8x72xf32> to vector<8x72xf32>
    %c0_80 = arith.constant 0 : index
    %c0_81 = arith.constant 0 : index
    %129 = vector.load %arg7[%c0_80, %c0_81] : memref<72x512xf32, #tpu.memory_space<vmem>>, vector<72x512xf32>
    %cst_82 = arith.constant dense<0.000000e+00> : vector<8x512xf32>
    %130 = tpu.matmul %128, %129, %cst_82 {dimension_numbers = #tpu.dot_dimension_numbers<[1], [0], [0], [1], [0, 0, 1, 1], [], []>} : vector<8x72xf32>, vector<72x512xf32>, vector<8x512xf32> -> vector<8x512xf32>
    %c0_83 = arith.constant 0 : index
    %c0_84 = arith.constant 0 : index
    %c0_85 = arith.constant 0 : index
    %131 = vector.load %arg3[%c0_83, %c0_84, %c0_85] : memref<2x8x1xf32, #tpu.memory_space<vmem>>, vector<1x8x1xf32>
    %132 = vector.shape_cast %131 : vector<1x8x1xf32> to vector<8x1xf32>
    %133 = vector.broadcast %132 : vector<8x1xf32> to vector<8x512xf32>
    %134 = arith.addf %130, %133 : vector<8x512xf32>
    %cst_86 = arith.constant 0.000000e+00 : f32
    %135 = vector.broadcast %cst_86 : f32 to vector<8x512xf32>
    %136 = arith.maximumf %134, %135 : vector<8x512xf32>
    %137 = vector.extract_strided_slice %136 {offsets = [0, 0], sizes = [8, 256], strides = [1, 1]} : vector<8x512xf32> to vector<8x256xf32>
    %c0_87 = arith.constant 0 : index
    %c128_88 = arith.constant 128 : index
    %138 = vector.load %arg6[%c0_87, %c128_88] : memref<8x1024xf32, #tpu.memory_space<vmem>>, vector<8x256xf32>
    tpu.vector_store %arg6[%c0_87, %c128_88], %137 {strides = array<i32>} : memref<8x1024xf32, #tpu.memory_space<vmem>>, vector<8x256xf32>,
    %139 = vector.extract_strided_slice %136 {offsets = [0, 256], sizes = [8, 256], strides = [1, 1]} : vector<8x512xf32> to vector<8x256xf32>
    %c0_89 = arith.constant 0 : index
    %c640_90 = arith.constant 640 : index
    %140 = vector.load %arg6[%c0_89, %c640_90] : memref<8x1024xf32, #tpu.memory_space<vmem>>, vector<8x256xf32>
    tpu.vector_store %arg6[%c0_89, %c640_90], %139 {strides = array<i32>} : memref<8x1024xf32, #tpu.memory_space<vmem>>, vector<8x256xf32>,
    %c0_91 = arith.constant 0 : index
    %c111_92 = arith.constant 111 : index
    %141 = vector.load %arg6[%c0_91, %c111_92] : memref<8x1024xf32, #tpu.memory_space<vmem>>, vector<8x256xf32>
    %cst_93 = arith.constant 0.000000e+00 : f32
    %142 = vector.shape_cast %33 : vector<1x256xi1> to vector<1x256xi1>
    %143 = vector.broadcast %142 : vector<1x256xi1> to vector<8x256xi1>
    %144 = vector.broadcast %cst_93 : f32 to vector<8x256xf32>
    %145 = arith.select %143, %141, %144 : vector<8x256xi1>, vector<8x256xf32>
    %c0_94 = arith.constant 0 : index
    %c0_95 = arith.constant 0 : index
    %146 = vector.load %arg7[%c0_94, %c0_95] : memref<72x512xf32, #tpu.memory_space<vmem>>, vector<8x256xf32>
    tpu.vector_store %arg7[%c0_94, %c0_95], %145 {strides = array<i32>} : memref<72x512xf32, #tpu.memory_space<vmem>>, vector<8x256xf32>,
    %c0_96 = arith.constant 0 : index
    %c623_97 = arith.constant 623 : index
    %147 = vector.load %arg6[%c0_96, %c623_97] : memref<8x1024xf32, #tpu.memory_space<vmem>>, vector<8x256xf32>
    %cst_98 = arith.constant 0.000000e+00 : f32
    %148 = vector.shape_cast %33 : vector<1x256xi1> to vector<1x256xi1>
    %149 = vector.broadcast %148 : vector<1x256xi1> to vector<8x256xi1>
    %150 = vector.broadcast %cst_98 : f32 to vector<8x256xf32>
    %151 = arith.select %149, %147, %150 : vector<8x256xi1>, vector<8x256xf32>
    %c0_99 = arith.constant 0 : index
    %c256_100 = arith.constant 256 : index
    %152 = vector.load %arg7[%c0_99, %c256_100] : memref<72x512xf32, #tpu.memory_space<vmem>>, vector<8x256xf32>
    tpu.vector_store %arg7[%c0_99, %c256_100], %151 {strides = array<i32>} : memref<72x512xf32, #tpu.memory_space<vmem>>, vector<8x256xf32>,
    %c0_101 = arith.constant 0 : index
    %c112_102 = arith.constant 112 : index
    %153 = vector.load %arg6[%c0_101, %c112_102] : memref<8x1024xf32, #tpu.memory_space<vmem>>, vector<8x256xf32>
    %c8_103 = arith.constant 8 : index
    %c0_104 = arith.constant 0 : index
    %154 = vector.load %arg7[%c8_103, %c0_104] : memref<72x512xf32, #tpu.memory_space<vmem>>, vector<8x256xf32>
    tpu.vector_store %arg7[%c8_103, %c0_104], %153 {strides = array<i32>} : memref<72x512xf32, #tpu.memory_space<vmem>>, vector<8x256xf32>,
    %c0_105 = arith.constant 0 : index
    %c624_106 = arith.constant 624 : index
    %155 = vector.load %arg6[%c0_105, %c624_106] : memref<8x1024xf32, #tpu.memory_space<vmem>>, vector<8x256xf32>
    %c8_107 = arith.constant 8 : index
    %c256_108 = arith.constant 256 : index
    %156 = vector.load %arg7[%c8_107, %c256_108] : memref<72x512xf32, #tpu.memory_space<vmem>>, vector<8x256xf32>
    tpu.vector_store %arg7[%c8_107, %c256_108], %155 {strides = array<i32>} : memref<72x512xf32, #tpu.memory_space<vmem>>, vector<8x256xf32>,
    %c0_109 = arith.constant 0 : index
    %c113_110 = arith.constant 113 : index
    %157 = vector.load %arg6[%c0_109, %c113_110] : memref<8x1024xf32, #tpu.memory_space<vmem>>, vector<8x256xf32>
    %cst_111 = arith.constant 0.000000e+00 : f32
    %158 = vector.shape_cast %42 : vector<1x256xi1> to vector<1x256xi1>
    %159 = vector.broadcast %158 : vector<1x256xi1> to vector<8x256xi1>
    %160 = vector.broadcast %cst_111 : f32 to vector<8x256xf32>
    %161 = arith.select %159, %157, %160 : vector<8x256xi1>, vector<8x256xf32>
    %c16_112 = arith.constant 16 : index
    %c0_113 = arith.constant 0 : index
    %162 = vector.load %arg7[%c16_112, %c0_113] : memref<72x512xf32, #tpu.memory_space<vmem>>, vector<8x256xf32>
    tpu.vector_store %arg7[%c16_112, %c0_113], %161 {strides = array<i32>} : memref<72x512xf32, #tpu.memory_space<vmem>>, vector<8x256xf32>,
    %c0_114 = arith.constant 0 : index
    %c625_115 = arith.constant 625 : index
    %163 = vector.load %arg6[%c0_114, %c625_115] : memref<8x1024xf32, #tpu.memory_space<vmem>>, vector<8x256xf32>
    %cst_116 = arith.constant 0.000000e+00 : f32
    %164 = vector.shape_cast %42 : vector<1x256xi1> to vector<1x256xi1>
    %165 = vector.broadcast %164 : vector<1x256xi1> to vector<8x256xi1>
    %166 = vector.broadcast %cst_116 : f32 to vector<8x256xf32>
    %167 = arith.select %165, %163, %166 : vector<8x256xi1>, vector<8x256xf32>
    %c16_117 = arith.constant 16 : index
    %c256_118 = arith.constant 256 : index
    %168 = vector.load %arg7[%c16_117, %c256_118] : memref<72x512xf32, #tpu.memory_space<vmem>>, vector<8x256xf32>
    tpu.vector_store %arg7[%c16_117, %c256_118], %167 {strides = array<i32>} : memref<72x512xf32, #tpu.memory_space<vmem>>, vector<8x256xf32>,
    %c0_119 = arith.constant 0 : index
    %c127_120 = arith.constant 127 : index
    %169 = vector.load %arg6[%c0_119, %c127_120] : memref<8x1024xf32, #tpu.memory_space<vmem>>, vector<8x256xf32>
    %cst_121 = arith.constant 0.000000e+00 : f32
    %170 = vector.shape_cast %33 : vector<1x256xi1> to vector<1x256xi1>
    %171 = vector.broadcast %170 : vector<1x256xi1> to vector<8x256xi1>
    %172 = vector.broadcast %cst_121 : f32 to vector<8x256xf32>
    %173 = arith.select %171, %169, %172 : vector<8x256xi1>, vector<8x256xf32>
    %c24_122 = arith.constant 24 : index
    %c0_123 = arith.constant 0 : index
    %174 = vector.load %arg7[%c24_122, %c0_123] : memref<72x512xf32, #tpu.memory_space<vmem>>, vector<8x256xf32>
    tpu.vector_store %arg7[%c24_122, %c0_123], %173 {strides = array<i32>} : memref<72x512xf32, #tpu.memory_space<vmem>>, vector<8x256xf32>,
    %c0_124 = arith.constant 0 : index
    %c639_125 = arith.constant 639 : index
    %175 = vector.load %arg6[%c0_124, %c639_125] : memref<8x1024xf32, #tpu.memory_space<vmem>>, vector<8x256xf32>
    %cst_126 = arith.constant 0.000000e+00 : f32
    %176 = vector.shape_cast %33 : vector<1x256xi1> to vector<1x256xi1>
    %177 = vector.broadcast %176 : vector<1x256xi1> to vector<8x256xi1>
    %178 = vector.broadcast %cst_126 : f32 to vector<8x256xf32>
    %179 = arith.select %177, %175, %178 : vector<8x256xi1>, vector<8x256xf32>
    %c24_127 = arith.constant 24 : index
    %c256_128 = arith.constant 256 : index
    %180 = vector.load %arg7[%c24_127, %c256_128] : memref<72x512xf32, #tpu.memory_space<vmem>>, vector<8x256xf32>
    tpu.vector_store %arg7[%c24_127, %c256_128], %179 {strides = array<i32>} : memref<72x512xf32, #tpu.memory_space<vmem>>, vector<8x256xf32>,
    %c0_129 = arith.constant 0 : index
    %c128_130 = arith.constant 128 : index
    %181 = vector.load %arg6[%c0_129, %c128_130] : memref<8x1024xf32, #tpu.memory_space<vmem>>, vector<8x256xf32>
    %c32_131 = arith.constant 32 : index
    %c0_132 = arith.constant 0 : index
    %182 = vector.load %arg7[%c32_131, %c0_132] : memref<72x512xf32, #tpu.memory_space<vmem>>, vector<8x256xf32>
    tpu.vector_store %arg7[%c32_131, %c0_132], %181 {strides = array<i32>} : memref<72x512xf32, #tpu.memory_space<vmem>>, vector<8x256xf32>,
    %c0_133 = arith.constant 0 : index
    %c640_134 = arith.constant 640 : index
    %183 = vector.load %arg6[%c0_133, %c640_134] : memref<8x1024xf32, #tpu.memory_space<vmem>>, vector<8x256xf32>
    %c32_135 = arith.constant 32 : index
    %c256_136 = arith.constant 256 : index
    %184 = vector.load %arg7[%c32_135, %c256_136] : memref<72x512xf32, #tpu.memory_space<vmem>>, vector<8x256xf32>
    tpu.vector_store %arg7[%c32_135, %c256_136], %183 {strides = array<i32>} : memref<72x512xf32, #tpu.memory_space<vmem>>, vector<8x256xf32>,
    %c0_137 = arith.constant 0 : index
    %c129_138 = arith.constant 129 : index
    %185 = vector.load %arg6[%c0_137, %c129_138] : memref<8x1024xf32, #tpu.memory_space<vmem>>, vector<8x256xf32>
    %cst_139 = arith.constant 0.000000e+00 : f32
    %186 = vector.shape_cast %42 : vector<1x256xi1> to vector<1x256xi1>
    %187 = vector.broadcast %186 : vector<1x256xi1> to vector<8x256xi1>
    %188 = vector.broadcast %cst_139 : f32 to vector<8x256xf32>
    %189 = arith.select %187, %185, %188 : vector<8x256xi1>, vector<8x256xf32>
    %c40_140 = arith.constant 40 : index
    %c0_141 = arith.constant 0 : index
    %190 = vector.load %arg7[%c40_140, %c0_141] : memref<72x512xf32, #tpu.memory_space<vmem>>, vector<8x256xf32>
    tpu.vector_store %arg7[%c40_140, %c0_141], %189 {strides = array<i32>} : memref<72x512xf32, #tpu.memory_space<vmem>>, vector<8x256xf32>,
    %c0_142 = arith.constant 0 : index
    %c641_143 = arith.constant 641 : index
    %191 = vector.load %arg6[%c0_142, %c641_143] : memref<8x1024xf32, #tpu.memory_space<vmem>>, vector<8x256xf32>
    %cst_144 = arith.constant 0.000000e+00 : f32
    %192 = vector.shape_cast %42 : vector<1x256xi1> to vector<1x256xi1>
    %193 = vector.broadcast %192 : vector<1x256xi1> to vector<8x256xi1>
    %194 = vector.broadcast %cst_144 : f32 to vector<8x256xf32>
    %195 = arith.select %193, %191, %194 : vector<8x256xi1>, vector<8x256xf32>
    %c40_145 = arith.constant 40 : index
    %c256_146 = arith.constant 256 : index
    %196 = vector.load %arg7[%c40_145, %c256_146] : memref<72x512xf32, #tpu.memory_space<vmem>>, vector<8x256xf32>
    tpu.vector_store %arg7[%c40_145, %c256_146], %195 {strides = array<i32>} : memref<72x512xf32, #tpu.memory_space<vmem>>, vector<8x256xf32>,
    %c0_147 = arith.constant 0 : index
    %c143_148 = arith.constant 143 : index
    %197 = vector.load %arg6[%c0_147, %c143_148] : memref<8x1024xf32, #tpu.memory_space<vmem>>, vector<8x256xf32>
    %cst_149 = arith.constant 0.000000e+00 : f32
    %198 = vector.shape_cast %33 : vector<1x256xi1> to vector<1x256xi1>
    %199 = vector.broadcast %198 : vector<1x256xi1> to vector<8x256xi1>
    %200 = vector.broadcast %cst_149 : f32 to vector<8x256xf32>
    %201 = arith.select %199, %197, %200 : vector<8x256xi1>, vector<8x256xf32>
    %c48_150 = arith.constant 48 : index
    %c0_151 = arith.constant 0 : index
    %202 = vector.load %arg7[%c48_150, %c0_151] : memref<72x512xf32, #tpu.memory_space<vmem>>, vector<8x256xf32>
    tpu.vector_store %arg7[%c48_150, %c0_151], %201 {strides = array<i32>} : memref<72x512xf32, #tpu.memory_space<vmem>>, vector<8x256xf32>,
    %c0_152 = arith.constant 0 : index
    %c655_153 = arith.constant 655 : index
    %203 = vector.load %arg6[%c0_152, %c655_153] : memref<8x1024xf32, #tpu.memory_space<vmem>>, vector<8x256xf32>
    %cst_154 = arith.constant 0.000000e+00 : f32
    %204 = vector.shape_cast %33 : vector<1x256xi1> to vector<1x256xi1>
    %205 = vector.broadcast %204 : vector<1x256xi1> to vector<8x256xi1>
    %206 = vector.broadcast %cst_154 : f32 to vector<8x256xf32>
    %207 = arith.select %205, %203, %206 : vector<8x256xi1>, vector<8x256xf32>
    %c48_155 = arith.constant 48 : index
    %c256_156 = arith.constant 256 : index
    %208 = vector.load %arg7[%c48_155, %c256_156] : memref<72x512xf32, #tpu.memory_space<vmem>>, vector<8x256xf32>
    tpu.vector_store %arg7[%c48_155, %c256_156], %207 {strides = array<i32>} : memref<72x512xf32, #tpu.memory_space<vmem>>, vector<8x256xf32>,
    %c0_157 = arith.constant 0 : index
    %c144_158 = arith.constant 144 : index
    %209 = vector.load %arg6[%c0_157, %c144_158] : memref<8x1024xf32, #tpu.memory_space<vmem>>, vector<8x256xf32>
    %c56_159 = arith.constant 56 : index
    %c0_160 = arith.constant 0 : index
    %210 = vector.load %arg7[%c56_159, %c0_160] : memref<72x512xf32, #tpu.memory_space<vmem>>, vector<8x256xf32>
    tpu.vector_store %arg7[%c56_159, %c0_160], %209 {strides = array<i32>} : memref<72x512xf32, #tpu.memory_space<vmem>>, vector<8x256xf32>,
    %c0_161 = arith.constant 0 : index
    %c656_162 = arith.constant 656 : index
    %211 = vector.load %arg6[%c0_161, %c656_162] : memref<8x1024xf32, #tpu.memory_space<vmem>>, vector<8x256xf32>
    %c56_163 = arith.constant 56 : index
    %c256_164 = arith.constant 256 : index
    %212 = vector.load %arg7[%c56_163, %c256_164] : memref<72x512xf32, #tpu.memory_space<vmem>>, vector<8x256xf32>
    tpu.vector_store %arg7[%c56_163, %c256_164], %211 {strides = array<i32>} : memref<72x512xf32, #tpu.memory_space<vmem>>, vector<8x256xf32>,
    %c0_165 = arith.constant 0 : index
    %c145_166 = arith.constant 145 : index
    %213 = vector.load %arg6[%c0_165, %c145_166] : memref<8x1024xf32, #tpu.memory_space<vmem>>, vector<8x256xf32>
    %cst_167 = arith.constant 0.000000e+00 : f32
    %214 = vector.shape_cast %42 : vector<1x256xi1> to vector<1x256xi1>
    %215 = vector.broadcast %214 : vector<1x256xi1> to vector<8x256xi1>
    %216 = vector.broadcast %cst_167 : f32 to vector<8x256xf32>
    %217 = arith.select %215, %213, %216 : vector<8x256xi1>, vector<8x256xf32>
    %c64_168 = arith.constant 64 : index
    %c0_169 = arith.constant 0 : index
    %218 = vector.load %arg7[%c64_168, %c0_169] : memref<72x512xf32, #tpu.memory_space<vmem>>, vector<8x256xf32>
    tpu.vector_store %arg7[%c64_168, %c0_169], %217 {strides = array<i32>} : memref<72x512xf32, #tpu.memory_space<vmem>>, vector<8x256xf32>,
    %c0_170 = arith.constant 0 : index
    %c657_171 = arith.constant 657 : index
    %219 = vector.load %arg6[%c0_170, %c657_171] : memref<8x1024xf32, #tpu.memory_space<vmem>>, vector<8x256xf32>
    %cst_172 = arith.constant 0.000000e+00 : f32
    %220 = vector.shape_cast %42 : vector<1x256xi1> to vector<1x256xi1>
    %221 = vector.broadcast %220 : vector<1x256xi1> to vector<8x256xi1>
    %222 = vector.broadcast %cst_172 : f32 to vector<8x256xf32>
    %223 = arith.select %221, %219, %222 : vector<8x256xi1>, vector<8x256xf32>
    %c64_173 = arith.constant 64 : index
    %c256_174 = arith.constant 256 : index
    %224 = vector.load %arg7[%c64_173, %c256_174] : memref<72x512xf32, #tpu.memory_space<vmem>>, vector<8x256xf32>
    tpu.vector_store %arg7[%c64_173, %c256_174], %223 {strides = array<i32>} : memref<72x512xf32, #tpu.memory_space<vmem>>, vector<8x256xf32>,
    %c1_175 = arith.constant 1 : index
    %c0_176 = arith.constant 0 : index
    %c0_177 = arith.constant 0 : index
    %225 = vector.load %arg2[%c1_175, %c0_176, %c0_177] : memref<2x8x72xf32, #tpu.memory_space<vmem>>, vector<1x8x72xf32>
    %226 = vector.shape_cast %225 : vector<1x8x72xf32> to vector<8x72xf32>
    %c0_178 = arith.constant 0 : index
    %c0_179 = arith.constant 0 : index
    %227 = vector.load %arg7[%c0_178, %c0_179] : memref<72x512xf32, #tpu.memory_space<vmem>>, vector<72x512xf32>
    %cst_180 = arith.constant dense<0.000000e+00> : vector<8x512xf32>
    %228 = tpu.matmul %226, %227, %cst_180 {dimension_numbers = #tpu.dot_dimension_numbers<[1], [0], [0], [1], [0, 0, 1, 1], [], []>} : vector<8x72xf32>, vector<72x512xf32>, vector<8x512xf32> -> vector<8x512xf32>
    %c1_181 = arith.constant 1 : index
    %c0_182 = arith.constant 0 : index
    %c0_183 = arith.constant 0 : index
    %229 = vector.load %arg3[%c1_181, %c0_182, %c0_183] : memref<2x8x1xf32, #tpu.memory_space<vmem>>, vector<1x8x1xf32>
    %230 = vector.shape_cast %229 : vector<1x8x1xf32> to vector<8x1xf32>
    %231 = vector.broadcast %230 : vector<8x1xf32> to vector<8x512xf32>
    %232 = arith.addf %228, %231 : vector<8x512xf32>
    %cst_184 = arith.constant 0.000000e+00 : f32
    %233 = vector.broadcast %cst_184 : f32 to vector<8x512xf32>
    %234 = arith.maximumf %232, %233 : vector<8x512xf32>
    %235 = vector.extract_strided_slice %234 {offsets = [0, 0], sizes = [8, 256], strides = [1, 1]} : vector<8x512xf32> to vector<8x256xf32>
    %c0_185 = arith.constant 0 : index
    %c128_186 = arith.constant 128 : index
    %236 = vector.load %arg6[%c0_185, %c128_186] : memref<8x1024xf32, #tpu.memory_space<vmem>>, vector<8x256xf32>
    tpu.vector_store %arg6[%c0_185, %c128_186], %235 {strides = array<i32>} : memref<8x1024xf32, #tpu.memory_space<vmem>>, vector<8x256xf32>,
    %237 = vector.extract_strided_slice %234 {offsets = [0, 256], sizes = [8, 256], strides = [1, 1]} : vector<8x512xf32> to vector<8x256xf32>
    %c0_187 = arith.constant 0 : index
    %c640_188 = arith.constant 640 : index
    %238 = vector.load %arg6[%c0_187, %c640_188] : memref<8x1024xf32, #tpu.memory_space<vmem>>, vector<8x256xf32>
    tpu.vector_store %arg6[%c0_187, %c640_188], %237 {strides = array<i32>} : memref<8x1024xf32, #tpu.memory_space<vmem>>, vector<8x256xf32>,
    %c0_189 = arith.constant 0 : index
    %c128_190 = arith.constant 128 : index
    %239 = vector.load %arg6[%c0_189, %c128_190] : memref<8x1024xf32, #tpu.memory_space<vmem>>, vector<8x256xf32>
    %c0_191 = arith.constant 0 : index
    %c129_192 = arith.constant 129 : index
    %240 = vector.load %arg6[%c0_191, %c129_192] : memref<8x1024xf32, #tpu.memory_space<vmem>>, vector<8x256xf32>
    %241 = arith.maximumf %239, %240 : vector<8x256xf32>
    %c0_193 = arith.constant 0 : index
    %c144_194 = arith.constant 144 : index
    %242 = vector.load %arg6[%c0_193, %c144_194] : memref<8x1024xf32, #tpu.memory_space<vmem>>, vector<8x256xf32>
    %243 = arith.maximumf %241, %242 : vector<8x256xf32>
    %c0_195 = arith.constant 0 : index
    %c145_196 = arith.constant 145 : index
    %244 = vector.load %arg6[%c0_195, %c145_196] : memref<8x1024xf32, #tpu.memory_space<vmem>>, vector<8x256xf32>
    %245 = arith.maximumf %243, %244 : vector<8x256xf32>
    %c0_197 = arith.constant 0 : index
    %c0_198 = arith.constant 0 : index
    %246 = vector.load %arg4[%c0_197, %c0_198] : memref<256x64xf32, #tpu.memory_space<vmem>>, vector<256x64xf32>
    %cst_199 = arith.constant dense<0.000000e+00> : vector<8x64xf32>
    %247 = tpu.matmul %245, %246, %cst_199 {dimension_numbers = #tpu.dot_dimension_numbers<[1], [0], [0], [1], [0, 0, 1, 1], [], []>} : vector<8x256xf32>, vector<256x64xf32>, vector<8x64xf32> -> vector<8x64xf32>
    %c0_200 = arith.constant 0 : index
    %c0_201 = arith.constant 0 : index
    %248 = vector.load %arg5[%c0_200, %c0_201] : memref<8x128xf32, #tpu.memory_space<vmem>>, vector<8x64xf32>
    tpu.vector_store %arg5[%c0_200, %c0_201], %247 {strides = array<i32>} : memref<8x128xf32, #tpu.memory_space<vmem>>, vector<8x64xf32>,
    %c0_202 = arith.constant 0 : index
    %c640_203 = arith.constant 640 : index
    %249 = vector.load %arg6[%c0_202, %c640_203] : memref<8x1024xf32, #tpu.memory_space<vmem>>, vector<8x256xf32>
    %c0_204 = arith.constant 0 : index
    %c641_205 = arith.constant 641 : index
    %250 = vector.load %arg6[%c0_204, %c641_205] : memref<8x1024xf32, #tpu.memory_space<vmem>>, vector<8x256xf32>
    %251 = arith.maximumf %249, %250 : vector<8x256xf32>
    %c0_206 = arith.constant 0 : index
    %c656_207 = arith.constant 656 : index
    %252 = vector.load %arg6[%c0_206, %c656_207] : memref<8x1024xf32, #tpu.memory_space<vmem>>, vector<8x256xf32>
    %253 = arith.maximumf %251, %252 : vector<8x256xf32>
    %c0_208 = arith.constant 0 : index
    %c657_209 = arith.constant 657 : index
    %254 = vector.load %arg6[%c0_208, %c657_209] : memref<8x1024xf32, #tpu.memory_space<vmem>>, vector<8x256xf32>
    %255 = arith.maximumf %253, %254 : vector<8x256xf32>
    %c0_210 = arith.constant 0 : index
    %c0_211 = arith.constant 0 : index
    %256 = vector.load %arg4[%c0_210, %c0_211] : memref<256x64xf32, #tpu.memory_space<vmem>>, vector<256x64xf32>
    %cst_212 = arith.constant dense<0.000000e+00> : vector<8x64xf32>
    %257 = tpu.matmul %255, %256, %cst_212 {dimension_numbers = #tpu.dot_dimension_numbers<[1], [0], [0], [1], [0, 0, 1, 1], [], []>} : vector<8x256xf32>, vector<256x64xf32>, vector<8x64xf32> -> vector<8x64xf32>
    %c0_213 = arith.constant 0 : index
    %c64_214 = arith.constant 64 : index
    %258 = vector.load %arg5[%c0_213, %c64_214] : memref<8x128xf32, #tpu.memory_space<vmem>>, vector<8x64xf32>
    tpu.vector_store %arg5[%c0_213, %c64_214], %257 {strides = array<i32>} : memref<8x128xf32, #tpu.memory_space<vmem>>, vector<8x64xf32>,
    return
  }
  func.func @transform_0(%arg0: i32) -> (i32, i32, i32) {
    %c0_i32 = arith.constant 0 : i32
    %c0_i32_0 = arith.constant 0 : i32
    %c0_i32_1 = arith.constant 0 : i32
    return %arg0, %c0_i32, %c0_i32_0 : i32, i32, i32
  }
  func.func @transform_1(%arg0: i32) -> (i32, i32, i32) {
    %c0_i32 = arith.constant 0 : i32
    %c0_i32_0 = arith.constant 0 : i32
    %c0_i32_1 = arith.constant 0 : i32
    %c0_i32_2 = arith.constant 0 : i32
    return %c0_i32, %c0_i32_0, %c0_i32_1 : i32, i32, i32
  }
  func.func @transform_2(%arg0: i32) -> (i32, i32, i32) {
    %c0_i32 = arith.constant 0 : i32
    %c0_i32_0 = arith.constant 0 : i32
    %c0_i32_1 = arith.constant 0 : i32
    %c0_i32_2 = arith.constant 0 : i32
    return %c0_i32, %c0_i32_0, %c0_i32_1 : i32, i32, i32
  }
  func.func @transform_3(%arg0: i32) -> (i32, i32) {
    %c0_i32 = arith.constant 0 : i32
    %c0_i32_0 = arith.constant 0 : i32
    %c0_i32_1 = arith.constant 0 : i32
    return %c0_i32, %c0_i32_0 : i32, i32
  }
  func.func @transform_4(%arg0: i32) -> (i32, i32) {
    %c0_i32 = arith.constant 0 : i32
    %c0_i32_0 = arith.constant 0 : i32
    return %arg0, %c0_i32 : i32, i32
  }
}

</mosaic_0001>

<llo_original>
// kernel: tpu_custom_call.1
$region0: #{tpu_custom_call.1}
  #allocation0 [shape = 'u32[]', space=smem, size = 0x4, offset = 0x4, fixed_abs, tag = 'smem constant byte address 0x4 - core index']
  #allocation1 [shape = 'u32[144,128]{1,0:T(1,128)}', space=vmem, size = 0x12000, scoped, tag = 'internal scratch']
  #allocation2 [shape = 'f32[8,1024]{1,0:T(8,128)}', space=vmem, size = 0x8000, scoped, tag = 'scratch operand']
  #allocation3 [shape = 'f32[72,512]{1,0:T(8,128)}', space=vmem, size = 0x24000, scoped, tag = 'scratch operand']
  %s0 = inlined_call_operand.vmem [shape: f32[2,4,256], index: 0, kind: input, shape index: {}]
  %s1 = inlined_call_operand.vmem [shape: f32[2,8,72], index: 1, kind: input, shape index: {}]
  %s2 = inlined_call_operand.vmem [shape: f32[2,8,1], index: 2, kind: input, shape index: {}]
  %s3 = inlined_call_operand.vmem [shape: f32[256,64], index: 3, kind: input, shape index: {}]
  %s4 = inlined_call_operand.hbm [shape: f32[8,128], index: 4, kind: output, shape index: {}]
  %s5 = sld [smem:[#allocation0]]
  $region26: #{tpu_custom_call.1} parent=0
    _
  %s7 = ssub.s32 1, %s5
  %s8 = scalar_select 0, %s7, %s5
  $region1: #{tpu_custom_call.1} parent=0
    #allocation4 [shape = 'u8[4096]{0}', space=vmem, size = 0x1000, scoped, tag = 'output window, operand 0, single buffered']
    #allocation5 [shape = 's32[1]{0}', space=sflag, size = 0x4, scoped, tag = 'scoped memory for tpu_custom_call.1']
    %9 = vsyncpa [#allocation5], 0
    // Predicated region
    $region2: #{tpu_custom_call.1} parent=1 // pred_check
      _
    $region3: #{tpu_custom_call.1} parent=1 // pred_check_branch
      %11 = sbr.rel (0) target = $region5
    $region4: #{tpu_custom_call.1} parent=1 // pred_region
      _
    $region5: #{tpu_custom_call.1} parent=1 // pred_fallthru
      _
    // Predicated region
    $region6: #{tpu_custom_call.1} parent=1 // pred_check
      _
    $region7: #{tpu_custom_call.1} parent=1 // pred_check_branch
      %13 = sbr.rel (0) target = $region9
    $region8: #{tpu_custom_call.1} parent=1 // pred_region
      _
    $region9: #{tpu_custom_call.1} parent=1 // pred_fallthru
      _
    // Predicated region
    $region10: #{tpu_custom_call.1} parent=1 // pred_check
      _
    $region11: #{tpu_custom_call.1} parent=1 // pred_check_branch
      %15 = sbr.rel (0) target = $region13
    $region12: #{tpu_custom_call.1} parent=1 // pred_region
      _
    $region13: #{tpu_custom_call.1} parent=1 // pred_fallthru
      _
    // Predicated region
    $region14: #{tpu_custom_call.1} parent=1 // pred_check
      _
    $region15: #{tpu_custom_call.1} parent=1 // pred_check_branch
      %17 = sbr.rel (0) target = $region17
    $region16: #{tpu_custom_call.1} parent=1 // pred_region
      _
    $region17: #{tpu_custom_call.1} parent=1 // pred_fallthru
      _
    %18 = vst [vmem:[#allocation2] sm:$0xff] 0.0
    %19 = vst [vmem:[#allocation2 + $0x8] sm:$0xff] 0.0
    %20 = vst [vmem:[#allocation2 + $0x10] sm:$0xff] 0.0
    %21 = vst [vmem:[#allocation2 + $0x18] sm:$0xff] 0.0
    %22 = vst [vmem:[#allocation2 + $0x20] sm:$0xff] 0.0
    %23 = vst [vmem:[#allocation2 + $0x28] sm:$0xff] 0.0
    %24 = vst [vmem:[#allocation2 + $0x30] sm:$0xff] 0.0
    %25 = vst [vmem:[#allocation2 + $0x38] sm:$0xff] 0.0
    %v26 = vld [vmem:[%s0] sm:$0xff]
    %v28 = vcombine.high %v26, %v26
    %30 = vst [vmem:[#allocation2 + $0x8] sm:$0xf] %v26
    %31 = vst [vmem:[#allocation2 + $0x10] sm:$0xf] %v28
    %s32 = scalar_lea.vmem %s0, 8
    %v33 = vld [vmem:[%s32] sm:$0xff]
    %v35 = vcombine.high %v33, %v33
    %37 = vst [vmem:[#allocation2 + $0x28] sm:$0xf] %v33
    %38 = vst [vmem:[#allocation2 + $0x30] sm:$0xf] %v35
    %v39 = vlaneseq
    %v40 = vand.u32 %v39, 127
    %v41 = vadd.s32 %v40, 128
    %vm42 = vcmp.lt.s32.totalorder %v40, 0
    %v43 = vsub.s32 0, %v40
    %v44 = vsel %vm42, %v43, %v40
    %v45 = vshrl.u32 %v44, 4
    %v46 = vand.u32 %v44, 15
    %v47 = vsub.s32 0, %v46
    %v48 = vsel %vm42, %v47, %v46
    %vm49 = vcmp.lt.s32.totalorder %v41, 0
    %v50 = vsub.s32 0, %v41
    %v51 = vsel %vm49, %v50, %v41
    %v52 = vshrl.u32 %v51, 4
    %v53 = vand.u32 %v51, 15
    %v54 = vsub.s32 0, %v53
    %v55 = vsel %vm49, %v54, %v53
    %vm56 = vcmp.ne.s32.totalorder %v48, 0
    %vm57 = vcmp.ne.s32.totalorder %v55, 0
    %vm58 = vcmp.lt.s32.totalorder %v48, 0
    %vm59 = vcmp.lt.s32.totalorder %v55, 0
    %vm60 = vmand %vm58, %vm56
    %vm61 = vmand %vm59, %vm57
    %v62 = vadd.s32 %v48, 16
    %v63 = vadd.s32 %v55, 16
    %v64 = vsel %vm60, %v62, %v48
    %v65 = vsel %vm61, %v63, %v55
    %v66 = vadd.s32 %v64, 4294967295
    %v67 = vadd.s32 %v65, 4294967295
    %vm68 = vcmp.ge.s32.totalorder %v66, 0
    %vm69 = vcmp.ge.s32.totalorder %v67, 0
    %vm70 = vcmp.lt.s32.totalorder %v66, 16
    %vm71 = vcmp.lt.s32.totalorder %v67, 16
    %vm72 = vmand %vm68, %vm70
    %vm73 = vmand %vm69, %vm71
    %v74 = vadd.s32 %v64, 1
    %v75 = vadd.s32 %v65, 1
    %vm76 = vcmp.ge.s32.totalorder %v74, 0
    %vm77 = vcmp.ge.s32.totalorder %v75, 0
    %vm78 = vcmp.lt.s32.totalorder %v74, 16
    %vm79 = vcmp.lt.s32.totalorder %v75, 16
    %vm80 = vmand %vm76, %vm78
    %vm81 = vmand %vm77, %vm79
    %v82 = vld [vmem:[#allocation2] sm:$0xff]
    %v83 = vld [vmem:[#allocation2 + $0x8] sm:$0xff]
    %v84 = vld [vmem:[#allocation2 + $0x10] sm:$0xff]
    %v85 = vsel %vm72, 1, 0
    %v86 = vsel %vm73, 1, 0
    %vm87 = vcmp.eq.s32.totalorder %v85, 1
    %vm88 = vcmp.eq.s32.totalorder %v86, 1
    %92 = vrot.lane.b32.xlu0 %v82, 17
    %v93 = vpop.permute.xlu0 %92
    %94 = vrot.lane.b32.xlu0 %v83, 17
    %v95 = vpop.permute.xlu0 %94
    %96 = vrot.lane.b32.xlu0 %v84, 17
    %v97 = vpop.permute.xlu0 %96
    %vm98 = vcmask 138240
    %v99 = vsel %vm98, %v93, %v95
    %v100 = vsel %vm98, %v95, %v97
    %v103 = vsel %vm87, %v99, 0.0
    %v104 = vsel %vm88, %v100, 0.0
    %105 = vst [vmem:[#allocation3] sm:$0xff] %v103
    %106 = vst [vmem:[#allocation3 + $0x8] sm:$0xff] %v104
    %v107 = vld [vmem:[#allocation2 + $0x20] sm:$0xff]
    %v108 = vld [vmem:[#allocation2 + $0x28] sm:$0xff]
    %v109 = vld [vmem:[#allocation2 + $0x30] sm:$0xff]
    %113 = vrot.lane.b32.xlu0 %v107, 17
    %v114 = vpop.permute.xlu0 %113
    %115 = vrot.lane.b32.xlu0 %v108, 17
    %v116 = vpop.permute.xlu0 %115
    %117 = vrot.lane.b32.xlu0 %v109, 17
    %v118 = vpop.permute.xlu0 %117
    %v119 = vsel %vm98, %v114, %v116
    %v120 = vsel %vm98, %v116, %v118
    %v123 = vsel %vm87, %v119, 0.0
    %v124 = vsel %vm88, %v120, 0.0
    %125 = vst [vmem:[#allocation3 + $0x10] sm:$0xff] %v123
    %126 = vst [vmem:[#allocation3 + $0x18] sm:$0xff] %v124
    %v127 = vld [vmem:[#allocation2] sm:$0xff]
    %v128 = vld [vmem:[#allocation2 + $0x8] sm:$0xff]
    %v129 = vld [vmem:[#allocation2 + $0x10] sm:$0xff]
    %133 = vrot.lane.b32.xlu0 %v127, 16
    %v134 = vpop.permute.xlu0 %133
    %135 = vrot.lane.b32.xlu0 %v128, 16
    %v136 = vpop.permute.xlu0 %135
    %137 = vrot.lane.b32.xlu0 %v129, 16
    %v138 = vpop.permute.xlu0 %137
    %vm139 = vcmask 130048
    %v140 = vsel %vm139, %v134, %v136
    %v141 = vsel %vm139, %v136, %v138
    %144 = vst [vmem:[#allocation3 + $0x20] sm:$0xff] %v140
    %145 = vst [vmem:[#allocation3 + $0x28] sm:$0xff] %v141
    %v146 = vld [vmem:[#allocation2 + $0x20] sm:$0xff]
    %v147 = vld [vmem:[#allocation2 + $0x28] sm:$0xff]
    %v148 = vld [vmem:[#allocation2 + $0x30] sm:$0xff]
    %152 = vrot.lane.b32.xlu0 %v146, 16
    %v153 = vpop.permute.xlu0 %152
    %154 = vrot.lane.b32.xlu0 %v147, 16
    %v155 = vpop.permute.xlu0 %154
    %156 = vrot.lane.b32.xlu0 %v148, 16
    %v157 = vpop.permute.xlu0 %156
    %v158 = vsel %vm139, %v153, %v155
    %v159 = vsel %vm139, %v155, %v157
    %162 = vst [vmem:[#allocation3 + $0x30] sm:$0xff] %v158
    %163 = vst [vmem:[#allocation3 + $0x38] sm:$0xff] %v159
    %v164 = vld [vmem:[#allocation2] sm:$0xff]
    %v165 = vld [vmem:[#allocation2 + $0x8] sm:$0xff]
    %v166 = vld [vmem:[#allocation2 + $0x10] sm:$0xff]
    %v167 = vsel %vm80, 1, 0
    %v168 = vsel %vm81, 1, 0
    %vm169 = vcmp.eq.s32.totalorder %v167, 1
    %vm170 = vcmp.eq.s32.totalorder %v168, 1
    %174 = vrot.lane.b32.xlu0 %v164, 15
    %v175 = vpop.permute.xlu0 %174
    %176 = vrot.lane.b32.xlu0 %v165, 15
    %v177 = vpop.permute.xlu0 %176
    %178 = vrot.lane.b32.xlu0 %v166, 15
    %v179 = vpop.permute.xlu0 %178
    %vm180 = vcmask 121856
    %v181 = vsel %vm180, %v175, %v177
    %v182 = vsel %vm180, %v177, %v179
    %v185 = vsel %vm169, %v181, 0.0
    %v186 = vsel %vm170, %v182, 0.0
    %187 = vst [vmem:[#allocation3 + $0x40] sm:$0xff] %v185
    %188 = vst [vmem:[#allocation3 + $0x48] sm:$0xff] %v186
    %v189 = vld [vmem:[#allocation2 + $0x20] sm:$0xff]
    %v190 = vld [vmem:[#allocation2 + $0x28] sm:$0xff]
    %v191 = vld [vmem:[#allocation2 + $0x30] sm:$0xff]
    %195 = vrot.lane.b32.xlu0 %v189, 15
    %v196 = vpop.permute.xlu0 %195
    %197 = vrot.lane.b32.xlu0 %v190, 15
    %v198 = vpop.permute.xlu0 %197
    %199 = vrot.lane.b32.xlu0 %v191, 15
    %v200 = vpop.permute.xlu0 %199
    %v201 = vsel %vm180, %v196, %v198
    %v202 = vsel %vm180, %v198, %v200
    %v205 = vsel %vm169, %v201, 0.0
    %v206 = vsel %vm170, %v202, 0.0
    %207 = vst [vmem:[#allocation3 + $0x50] sm:$0xff] %v205
    %208 = vst [vmem:[#allocation3 + $0x58] sm:$0xff] %v206
    %v209 = vld [vmem:[#allocation2] sm:$0xff]
    %v210 = vld [vmem:[#allocation2 + $0x8] sm:$0xff]
    %v211 = vld [vmem:[#allocation2 + $0x10] sm:$0xff]
    %215 = vrot.lane.b32.xlu0 %v209, 1
    %v216 = vpop.permute.xlu0 %215
    %217 = vrot.lane.b32.xlu0 %v210, 1
    %v218 = vpop.permute.xlu0 %217
    %219 = vrot.lane.b32.xlu0 %v211, 1
    %v220 = vpop.permute.xlu0 %219
    %vm221 = vcmask 7168
    %v222 = vsel %vm221, %v216, %v218
    %v223 = vsel %vm221, %v218, %v220
    %v226 = vsel %vm87, %v222, 0.0
    %v227 = vsel %vm88, %v223, 0.0
    %228 = vst [vmem:[#allocation3 + $0x60] sm:$0xff] %v226
    %229 = vst [vmem:[#allocation3 + $0x68] sm:$0xff] %v227
    %v230 = vld [vmem:[#allocation2 + $0x20] sm:$0xff]
    %v231 = vld [vmem:[#allocation2 + $0x28] sm:$0xff]
    %v232 = vld [vmem:[#allocation2 + $0x30] sm:$0xff]
    %236 = vrot.lane.b32.xlu0 %v230, 1
    %v237 = vpop.permute.xlu0 %236
    %238 = vrot.lane.b32.xlu0 %v231, 1
    %v239 = vpop.permute.xlu0 %238
    %240 = vrot.lane.b32.xlu0 %v232, 1
    %v241 = vpop.permute.xlu0 %240
    %v242 = vsel %vm221, %v237, %v239
    %v243 = vsel %vm221, %v239, %v241
    %v246 = vsel %vm87, %v242, 0.0
    %v247 = vsel %vm88, %v243, 0.0
    %248 = vst [vmem:[#allocation3 + $0x70] sm:$0xff] %v246
    %249 = vst [vmem:[#allocation3 + $0x78] sm:$0xff] %v247
    %v250 = vld [vmem:[#allocation2 + $0x8] sm:$0xff]
    %v251 = vld [vmem:[#allocation2 + $0x10] sm:$0xff]
    %252 = vst [vmem:[#allocation3 + $0x80] sm:$0xff] %v250
    %253 = vst [vmem:[#allocation3 + $0x88] sm:$0xff] %v251
    %v254 = vld [vmem:[#allocation2 + $0x28] sm:$0xff]
    %v255 = vld [vmem:[#allocation2 + $0x30] sm:$0xff]
    %256 = vst [vmem:[#allocation3 + $0x90] sm:$0xff] %v254
    %257 = vst [vmem:[#allocation3 + $0x98] sm:$0xff] %v255
    %v258 = vld [vmem:[#allocation2 + $0x8] sm:$0xff]
    %v259 = vld [vmem:[#allocation2 + $0x10] sm:$0xff]
    %v260 = vld [vmem:[#allocation2 + $0x18] sm:$0xff]
    %264 = vrot.lane.b32.xlu0 %v258, 127
    %v265 = vpop.permute.xlu0 %264
    %266 = vrot.lane.b32.xlu0 %v259, 127
    %v267 = vpop.permute.xlu0 %266
    %268 = vrot.lane.b32.xlu0 %v260, 127
    %v269 = vpop.permute.xlu0 %268
    %vm270 = vcmask 1039360
    %v271 = vsel %vm270, %v265, %v267
    %v272 = vsel %vm270, %v267, %v269
    %v275 = vsel %vm169, %v271, 0.0
    %v276 = vsel %vm170, %v272, 0.0
    %277 = vst [vmem:[#allocation3 + $0xa0] sm:$0xff] %v275
    %278 = vst [vmem:[#allocation3 + $0xa8] sm:$0xff] %v276
    %v279 = vld [vmem:[#allocation2 + $0x28] sm:$0xff]
    %v280 = vld [vmem:[#allocation2 + $0x30] sm:$0xff]
    %v281 = vld [vmem:[#allocation2 + $0x38] sm:$0xff]
    %285 = vrot.lane.b32.xlu0 %v279, 127
    %v286 = vpop.permute.xlu0 %285
    %287 = vrot.lane.b32.xlu0 %v280, 127
    %v288 = vpop.permute.xlu0 %287
    %289 = vrot.lane.b32.xlu0 %v281, 127
    %v290 = vpop.permute.xlu0 %289
    %v291 = vsel %vm270, %v286, %v288
    %v292 = vsel %vm270, %v288, %v290
    %v295 = vsel %vm169, %v291, 0.0
    %v296 = vsel %vm170, %v292, 0.0
    %297 = vst [vmem:[#allocation3 + $0xb0] sm:$0xff] %v295
    %298 = vst [vmem:[#allocation3 + $0xb8] sm:$0xff] %v296
    %v299 = vld [vmem:[#allocation2 + $0x8] sm:$0xff]
    %v300 = vld [vmem:[#allocation2 + $0x10] sm:$0xff]
    %v301 = vld [vmem:[#allocation2 + $0x18] sm:$0xff]
    %305 = vrot.lane.b32.xlu0 %v299, 113
    %v306 = vpop.permute.xlu0 %305
    %307 = vrot.lane.b32.xlu0 %v300, 113
    %v308 = vpop.permute.xlu0 %307
    %309 = vrot.lane.b32.xlu0 %v301, 113
    %v310 = vpop.permute.xlu0 %309
    %vm311 = vcmask 924672
    %v312 = vsel %vm311, %v306, %v308
    %v313 = vsel %vm311, %v308, %v310
    %v316 = vsel %vm87, %v312, 0.0
    %v317 = vsel %vm88, %v313, 0.0
    %318 = vst [vmem:[#allocation3 + $0xc0] sm:$0xff] %v316
    %319 = vst [vmem:[#allocation3 + $0xc8] sm:$0xff] %v317
    %v320 = vld [vmem:[#allocation2 + $0x28] sm:$0xff]
    %v321 = vld [vmem:[#allocation2 + $0x30] sm:$0xff]
    %v322 = vld [vmem:[#allocation2 + $0x38] sm:$0xff]
    %326 = vrot.lane.b32.xlu0 %v320, 113
    %v327 = vpop.permute.xlu0 %326
    %328 = vrot.lane.b32.xlu0 %v321, 113
    %v329 = vpop.permute.xlu0 %328
    %330 = vrot.lane.b32.xlu0 %v322, 113
    %v331 = vpop.permute.xlu0 %330
    %v332 = vsel %vm311, %v327, %v329
    %v333 = vsel %vm311, %v329, %v331
    %v336 = vsel %vm87, %v332, 0.0
    %v337 = vsel %vm88, %v333, 0.0
    %338 = vst [vmem:[#allocation3 + $0xd0] sm:$0xff] %v336
    %339 = vst [vmem:[#allocation3 + $0xd8] sm:$0xff] %v337
    %v340 = vld [vmem:[#allocation2 + $0x8] sm:$0xff]
    %v341 = vld [vmem:[#allocation2 + $0x10] sm:$0xff]
    %v342 = vld [vmem:[#allocation2 + $0x18] sm:$0xff]
    %346 = vrot.lane.b32.xlu0 %v340, 112
    %v347 = vpop.permute.xlu0 %346
    %348 = vrot.lane.b32.xlu0 %v341, 112
    %v349 = vpop.permute.xlu0 %348
    %350 = vrot.lane.b32.xlu0 %v342, 112
    %v351 = vpop.permute.xlu0 %350
    %vm352 = vcmask 916480
    %v353 = vsel %vm352, %v347, %v349
    %v354 = vsel %vm352, %v349, %v351
    %357 = vst [vmem:[#allocation3 + $0xe0] sm:$0xff] %v353
    %358 = vst [vmem:[#allocation3 + $0xe8] sm:$0xff] %v354
    %v359 = vld [vmem:[#allocation2 + $0x28] sm:$0xff]
    %v360 = vld [vmem:[#allocation2 + $0x30] sm:$0xff]
    %v361 = vld [vmem:[#allocation2 + $0x38] sm:$0xff]
    %365 = vrot.lane.b32.xlu0 %v359, 112
    %v366 = vpop.permute.xlu0 %365
    %367 = vrot.lane.b32.xlu0 %v360, 112
    %v368 = vpop.permute.xlu0 %367
    %369 = vrot.lane.b32.xlu0 %v361, 112
    %v370 = vpop.permute.xlu0 %369
    %v371 = vsel %vm352, %v366, %v368
    %v372 = vsel %vm352, %v368, %v370
    %375 = vst [vmem:[#allocation3 + $0xf0] sm:$0xff] %v371
    %376 = vst [vmem:[#allocation3 + $0xf8] sm:$0xff] %v372
    %v377 = vld [vmem:[#allocation2 + $0x8] sm:$0xff]
    %v378 = vld [vmem:[#allocation2 + $0x10] sm:$0xff]
    %v379 = vld [vmem:[#allocation2 + $0x18] sm:$0xff]
    %383 = vrot.lane.b32.xlu0 %v377, 111
    %v384 = vpop.permute.xlu0 %383
    %385 = vrot.lane.b32.xlu0 %v378, 111
    %v386 = vpop.permute.xlu0 %385
    %387 = vrot.lane.b32.xlu0 %v379, 111
    %v388 = vpop.permute.xlu0 %387
    %vm389 = vcmask 908288
    %v390 = vsel %vm389, %v384, %v386
    %v391 = vsel %vm389, %v386, %v388
    %v394 = vsel %vm169, %v390, 0.0
    %v395 = vsel %vm170, %v391, 0.0
    %396 = vst [vmem:[#allocation3 + $0x100] sm:$0xff] %v394
    %397 = vst [vmem:[#allocation3 + $0x108] sm:$0xff] %v395
    %v398 = vld [vmem:[#allocation2 + $0x28] sm:$0xff]
    %v399 = vld [vmem:[#allocation2 + $0x30] sm:$0xff]
    %v400 = vld [vmem:[#allocation2 + $0x38] sm:$0xff]
    %404 = vrot.lane.b32.xlu0 %v398, 111
    %v405 = vpop.permute.xlu0 %404
    %406 = vrot.lane.b32.xlu0 %v399, 111
    %v407 = vpop.permute.xlu0 %406
    %408 = vrot.lane.b32.xlu0 %v400, 111
    %v409 = vpop.permute.xlu0 %408
    %v410 = vsel %vm389, %v405, %v407
    %v411 = vsel %vm389, %v407, %v409
    %v414 = vsel %vm169, %v410, 0.0
    %v415 = vsel %vm170, %v411, 0.0
    %416 = vst [vmem:[#allocation3 + $0x110] sm:$0xff] %v414
    %417 = vst [vmem:[#allocation3 + $0x118] sm:$0xff] %v415
    %v418 = vld [vmem:[%s1] sm:$0xff]
    %v419 = vld [vmem:[#allocation3] sm:$0xff]
    %v420 = vld [vmem:[#allocation3 + $0x8] sm:$0xff]
    %v421 = vld [vmem:[#allocation3 + $0x10] sm:$0xff]
    %v422 = vld [vmem:[#allocation3 + $0x18] sm:$0xff]
    %v423 = vld [vmem:[#allocation3 + $0x20] sm:$0xff]
    %v424 = vld [vmem:[#allocation3 + $0x28] sm:$0xff]
    %v425 = vld [vmem:[#allocation3 + $0x30] sm:$0xff]
    %v426 = vld [vmem:[#allocation3 + $0x38] sm:$0xff]
    %v427 = vld [vmem:[#allocation3 + $0x40] sm:$0xff]
    %v428 = vld [vmem:[#allocation3 + $0x48] sm:$0xff]
    %v429 = vld [vmem:[#allocation3 + $0x50] sm:$0xff]
    %v430 = vld [vmem:[#allocation3 + $0x58] sm:$0xff]
    %v431 = vld [vmem:[#allocation3 + $0x60] sm:$0xff]
    %v432 = vld [vmem:[#allocation3 + $0x68] sm:$0xff]
    %v433 = vld [vmem:[#allocation3 + $0x70] sm:$0xff]
    %v434 = vld [vmem:[#allocation3 + $0x78] sm:$0xff]
    %v435 = vld [vmem:[#allocation3 + $0x80] sm:$0xff]
    %v436 = vld [vmem:[#allocation3 + $0x88] sm:$0xff]
    %v437 = vld [vmem:[#allocation3 + $0x90] sm:$0xff]
    %v438 = vld [vmem:[#allocation3 + $0x98] sm:$0xff]
    %v439 = vld [vmem:[#allocation3 + $0xa0] sm:$0xff]
    %v440 = vld [vmem:[#allocation3 + $0xa8] sm:$0xff]
    %v441 = vld [vmem:[#allocation3 + $0xb0] sm:$0xff]
    %v442 = vld [vmem:[#allocation3 + $0xb8] sm:$0xff]
    %v443 = vld [vmem:[#allocation3 + $0xc0] sm:$0xff]
    %v444 = vld [vmem:[#allocation3 + $0xc8] sm:$0xff]
    %v445 = vld [vmem:[#allocation3 + $0xd0] sm:$0xff]
    %v446 = vld [vmem:[#allocation3 + $0xd8] sm:$0xff]
    %v447 = vld [vmem:[#allocation3 + $0xe0] sm:$0xff]
    %v448 = vld [vmem:[#allocation3 + $0xe8] sm:$0xff]
    %v449 = vld [vmem:[#allocation3 + $0xf0] sm:$0xff]
    %v450 = vld [vmem:[#allocation3 + $0xf8] sm:$0xff]
    %v451 = vld [vmem:[#allocation3 + $0x100] sm:$0xff]
    %v452 = vld [vmem:[#allocation3 + $0x108] sm:$0xff]
    %v453 = vld [vmem:[#allocation3 + $0x110] sm:$0xff]
    %v454 = vld [vmem:[#allocation3 + $0x118] sm:$0xff]
    %v455 = vld [vmem:[%s2] sm:$0xff]
    %457 = vset.pattern.permute.xlu0 0
    %458 = vperm.xlu0 %457, %v455
    %v459 = vpop.permute.xlu0 %458
    %vm461 = vcmask 588800
    %v463 = vsel %vm461, %v418, 0
    %465 = vmatprep.subr.mxu0 0.0
    %466 = vmatpush1.msra.mxu0 0.0
    %467 = vmatprep.subr.mxu0 0.0
    %468 = vmatpush1.msra.mxu0 0.0
    %469 = vmatprep.subr.mxu0 0.0
    %470 = vmatpush1.msra.mxu0 0.0
    %471 = vmatprep.subr.mxu0 0.0
    %472 = vmatpush1.msra.mxu0 0.0
    %473 = vmatprep.subr.mxu0 0.0
    %474 = vmatpush1.msra.mxu0 0.0
    %475 = vmatprep.subr.mxu0 0.0
    %476 = vmatpush1.msra.mxu0 0.0
    %477 = vmatprep.subr.mxu0 0.0
    %478 = vmatpush1.msra.mxu0 0.0
    %479 = vmatprep.subr.mxu0 %v452
    %480 = vmatpush1.msra.mxu0 %v451
    %481 = vmatprep.subr.mxu0 %v448
    %482 = vmatpush1.msra.mxu0 %v447
    %483 = vmatprep.subr.mxu0 %v444
    %484 = vmatpush1.msra.mxu0 %v443
    %485 = vmatprep.subr.mxu0 %v440
    %486 = vmatpush1.msra.mxu0 %v439
    %487 = vmatprep.subr.mxu0 %v436
    %488 = vmatpush1.msra.mxu0 %v435
    %489 = vmatprep.subr.mxu0 %v432
    %490 = vmatpush1.msra.mxu0 %v431
    %491 = vmatprep.subr.mxu0 %v428
    %492 = vmatpush1.msra.mxu0 %v427
    %493 = vmatprep.subr.mxu0 %v424
    %494 = vmatpush1.msra.mxu0 %v423
    %495 = vmatprep.subr.mxu0 %v420
    %496 = vmatpush1.msra.mxu0 %v419
    %497 = vmatprep.subr.mxu0 0.0
    %498 = vmatpush2.msra.mxu0 0.0
    %499 = vmatprep.subr.mxu0 0.0
    %500 = vmatpush2.msra.mxu0 0.0
    %501 = vmatprep.subr.mxu0 0.0
    %502 = vmatpush2.msra.mxu0 0.0
    %503 = vmatprep.subr.mxu0 0.0
    %504 = vmatpush2.msra.mxu0 0.0
    %505 = vmatprep.subr.mxu0 0.0
    %506 = vmatpush2.msra.mxu0 0.0
    %507 = vmatprep.subr.mxu0 0.0
    %508 = vmatpush2.msra.mxu0 0.0
    %509 = vmatprep.subr.mxu0 0.0
    %510 = vmatpush2.msra.mxu0 0.0
    %511 = vmatprep.subr.mxu0 0.0
    %512 = vmatpush2.msra.mxu0 0.0
    %513 = vmatprep.subr.mxu0 0.0
    %514 = vmatpush2.msra.mxu0 0.0
    %515 = vmatprep.subr.mxu0 0.0
    %516 = vmatpush2.msra.mxu0 0.0
    %517 = vmatprep.subr.mxu0 0.0
    %518 = vmatpush2.msra.mxu0 0.0
    %519 = vmatprep.subr.mxu0 0.0
    %520 = vmatpush2.msra.mxu0 0.0
    %521 = vmatprep.subr.mxu0 0.0
    %522 = vmatpush2.msra.mxu0 0.0
    %523 = vmatprep.subr.mxu0 0.0
    %524 = vmatpush2.msra.mxu0 0.0
    %525 = vmatprep.subr.mxu0 0.0
    %526 = vmatpush2.msra.mxu0 0.0
    %527 = vmatprep.subr.mxu0 0.0
    %528 = vmatpush2.msra.mxu0 0.0
    %529 = vmatprep.mubr.f32.mxu0 0.0
    %530 = vmatmul.mubr.f32.gmra.mxu0 %v463
    %v531 = vpop.f32.mrf.mxu0
    %v532 = vadd.f32 %v459, %v531
    %v533 = vpop.f32.mrf.mxu0
    %v534 = vadd.f32 %v459, %v533
    %535 = vdwg.mxu0
    %536 = vmatprep.subr.mxu0 0.0
    %537 = vmatpush1.msra.mxu0 0.0
    %538 = vmatprep.subr.mxu0 0.0
    %539 = vmatpush1.msra.mxu0 0.0
    %540 = vmatprep.subr.mxu0 0.0
    %541 = vmatpush1.msra.mxu0 0.0
    %542 = vmatprep.subr.mxu0 0.0
    %543 = vmatpush1.msra.mxu0 0.0
    %544 = vmatprep.subr.mxu0 0.0
    %545 = vmatpush1.msra.mxu0 0.0
    %546 = vmatprep.subr.mxu0 0.0
    %547 = vmatpush1.msra.mxu0 0.0
    %548 = vmatprep.subr.mxu0 0.0
    %549 = vmatpush1.msra.mxu0 0.0
    %550 = vmatprep.subr.mxu0 %v454
    %551 = vmatpush1.msra.mxu0 %v453
    %552 = vmatprep.subr.mxu0 %v450
    %553 = vmatpush1.msra.mxu0 %v449
    %554 = vmatprep.subr.mxu0 %v446
    %555 = vmatpush1.msra.mxu0 %v445
    %556 = vmatprep.subr.mxu0 %v442
    %557 = vmatpush1.msra.mxu0 %v441
    %558 = vmatprep.subr.mxu0 %v438
    %559 = vmatpush1.msra.mxu0 %v437
    %560 = vmatprep.subr.mxu0 %v434
    %561 = vmatpush1.msra.mxu0 %v433
    %562 = vmatprep.subr.mxu0 %v430
    %563 = vmatpush1.msra.mxu0 %v429
    %564 = vmatprep.subr.mxu0 %v426
    %565 = vmatpush1.msra.mxu0 %v425
    %566 = vmatprep.subr.mxu0 %v422
    %567 = vmatpush1.msra.mxu0 %v421
    %568 = vmatprep.subr.mxu0 0.0
    %569 = vmatpush2.msra.mxu0 0.0
    %570 = vmatprep.subr.mxu0 0.0
    %571 = vmatpush2.msra.mxu0 0.0
    %572 = vmatprep.subr.mxu0 0.0
    %573 = vmatpush2.msra.mxu0 0.0
    %574 = vmatprep.subr.mxu0 0.0
    %575 = vmatpush2.msra.mxu0 0.0
    %576 = vmatprep.subr.mxu0 0.0
    %577 = vmatpush2.msra.mxu0 0.0
    %578 = vmatprep.subr.mxu0 0.0
    %579 = vmatpush2.msra.mxu0 0.0
    %580 = vmatprep.subr.mxu0 0.0
    %581 = vmatpush2.msra.mxu0 0.0
    %582 = vmatprep.subr.mxu0 0.0
    %583 = vmatpush2.msra.mxu0 0.0
    %584 = vmatprep.subr.mxu0 0.0
    %585 = vmatpush2.msra.mxu0 0.0
    %586 = vmatprep.subr.mxu0 0.0
    %587 = vmatpush2.msra.mxu0 0.0
    %588 = vmatprep.subr.mxu0 0.0
    %589 = vmatpush2.msra.mxu0 0.0
    %590 = vmatprep.subr.mxu0 0.0
    %591 = vmatpush2.msra.mxu0 0.0
    %592 = vmatprep.subr.mxu0 0.0
    %593 = vmatpush2.msra.mxu0 0.0
    %594 = vmatprep.subr.mxu0 0.0
    %595 = vmatpush2.msra.mxu0 0.0
    %596 = vmatprep.subr.mxu0 0.0
    %597 = vmatpush2.msra.mxu0 0.0
    %598 = vmatprep.subr.mxu0 0.0
    %599 = vmatpush2.msra.mxu0 0.0
    %600 = vmatprep.mubr.f32.mxu0 0.0
    %601 = vmatmul.mubr.f32.gmra.mxu0 %v463
    %v602 = vpop.f32.mrf.mxu0
    %v603 = vadd.f32 %v459, %v602
    %v604 = vpop.f32.mrf.mxu0
    %v605 = vadd.f32 %v459, %v604
    %606 = vdwg.mxu0
    %v607 = vmax.f32 %v532, 0.0
    %v608 = vmax.f32 %v534, 0.0
    %v609 = vmax.f32 %v603, 0.0
    %v610 = vmax.f32 %v605, 0.0
    %611 = vst [vmem:[#allocation2 + $0x8] sm:$0xff] %v607
    %612 = vst [vmem:[#allocation2 + $0x10] sm:$0xff] %v608
    %613 = vst [vmem:[#allocation2 + $0x28] sm:$0xff] %v609
    %614 = vst [vmem:[#allocation2 + $0x30] sm:$0xff] %v610
    %v615 = vld [vmem:[#allocation2] sm:$0xff]
    %v616 = vld [vmem:[#allocation2 + $0x8] sm:$0xff]
    %v617 = vld [vmem:[#allocation2 + $0x10] sm:$0xff]
    %621 = vrot.lane.b32.xlu0 %v615, 17
    %v622 = vpop.permute.xlu0 %621
    %623 = vrot.lane.b32.xlu0 %v616, 17
    %v624 = vpop.permute.xlu0 %623
    %625 = vrot.lane.b32.xlu0 %v617, 17
    %v626 = vpop.permute.xlu0 %625
    %v627 = vsel %vm98, %v622, %v624
    %v628 = vsel %vm98, %v624, %v626
    %v631 = vsel %vm87, %v627, 0.0
    %v632 = vsel %vm88, %v628, 0.0
    %633 = vst [vmem:[#allocation3] sm:$0xff] %v631
    %634 = vst [vmem:[#allocation3 + $0x8] sm:$0xff] %v632
    %v635 = vld [vmem:[#allocation2 + $0x20] sm:$0xff]
    %v636 = vld [vmem:[#allocation2 + $0x28] sm:$0xff]
    %v637 = vld [vmem:[#allocation2 + $0x30] sm:$0xff]
    %641 = vrot.lane.b32.xlu0 %v635, 17
    %v642 = vpop.permute.xlu0 %641
    %643 = vrot.lane.b32.xlu0 %v636, 17
    %v644 = vpop.permute.xlu0 %643
    %645 = vrot.lane.b32.xlu0 %v637, 17
    %v646 = vpop.permute.xlu0 %645
    %v647 = vsel %vm98, %v642, %v644
    %v648 = vsel %vm98, %v644, %v646
    %v651 = vsel %vm87, %v647, 0.0
    %v652 = vsel %vm88, %v648, 0.0
    %653 = vst [vmem:[#allocation3 + $0x10] sm:$0xff] %v651
    %654 = vst [vmem:[#allocation3 + $0x18] sm:$0xff] %v652
    %v655 = vld [vmem:[#allocation2] sm:$0xff]
    %v656 = vld [vmem:[#allocation2 + $0x8] sm:$0xff]
    %v657 = vld [vmem:[#allocation2 + $0x10] sm:$0xff]
    %661 = vrot.lane.b32.xlu0 %v655, 16
    %v662 = vpop.permute.xlu0 %661
    %663 = vrot.lane.b32.xlu0 %v656, 16
    %v664 = vpop.permute.xlu0 %663
    %665 = vrot.lane.b32.xlu0 %v657, 16
    %v666 = vpop.permute.xlu0 %665
    %v667 = vsel %vm139, %v662, %v664
    %v668 = vsel %vm139, %v664, %v666
    %671 = vst [vmem:[#allocation3 + $0x20] sm:$0xff] %v667
    %672 = vst [vmem:[#allocation3 + $0x28] sm:$0xff] %v668
    %v673 = vld [vmem:[#allocation2 + $0x20] sm:$0xff]
    %v674 = vld [vmem:[#allocation2 + $0x28] sm:$0xff]
    %v675 = vld [vmem:[#allocation2 + $0x30] sm:$0xff]
    %679 = vrot.lane.b32.xlu0 %v673, 16
    %v680 = vpop.permute.xlu0 %679
    %681 = vrot.lane.b32.xlu0 %v674, 16
    %v682 = vpop.permute.xlu0 %681
    %683 = vrot.lane.b32.xlu0 %v675, 16
    %v684 = vpop.permute.xlu0 %683
    %v685 = vsel %vm139, %v680, %v682
    %v686 = vsel %vm139, %v682, %v684
    %689 = vst [vmem:[#allocation3 + $0x30] sm:$0xff] %v685
    %690 = vst [vmem:[#allocation3 + $0x38] sm:$0xff] %v686
    %v691 = vld [vmem:[#allocation2] sm:$0xff]
    %v692 = vld [vmem:[#allocation2 + $0x8] sm:$0xff]
    %v693 = vld [vmem:[#allocation2 + $0x10] sm:$0xff]
    %697 = vrot.lane.b32.xlu0 %v691, 15
    %v698 = vpop.permute.xlu0 %697
    %699 = vrot.lane.b32.xlu0 %v692, 15
    %v700 = vpop.permute.xlu0 %699
    %701 = vrot.lane.b32.xlu0 %v693, 15
    %v702 = vpop.permute.xlu0 %701
    %v703 = vsel %vm180, %v698, %v700
    %v704 = vsel %vm180, %v700, %v702
    %v707 = vsel %vm169, %v703, 0.0
    %v708 = vsel %vm170, %v704, 0.0
    %709 = vst [vmem:[#allocation3 + $0x40] sm:$0xff] %v707
    %710 = vst [vmem:[#allocation3 + $0x48] sm:$0xff] %v708
    %v711 = vld [vmem:[#allocation2 + $0x20] sm:$0xff]
    %v712 = vld [vmem:[#allocation2 + $0x28] sm:$0xff]
    %v713 = vld [vmem:[#allocation2 + $0x30] sm:$0xff]
    %717 = vrot.lane.b32.xlu0 %v711, 15
    %v718 = vpop.permute.xlu0 %717
    %719 = vrot.lane.b32.xlu0 %v712, 15
    %v720 = vpop.permute.xlu0 %719
    %721 = vrot.lane.b32.xlu0 %v713, 15
    %v722 = vpop.permute.xlu0 %721
    %v723 = vsel %vm180, %v718, %v720
    %v724 = vsel %vm180, %v720, %v722
    %v727 = vsel %vm169, %v723, 0.0
    %v728 = vsel %vm170, %v724, 0.0
    %729 = vst [vmem:[#allocation3 + $0x50] sm:$0xff] %v727
    %730 = vst [vmem:[#allocation3 + $0x58] sm:$0xff] %v728
    %v731 = vld [vmem:[#allocation2] sm:$0xff]
    %v732 = vld [vmem:[#allocation2 + $0x8] sm:$0xff]
    %v733 = vld [vmem:[#allocation2 + $0x10] sm:$0xff]
    %737 = vrot.lane.b32.xlu0 %v731, 1
    %v738 = vpop.permute.xlu0 %737
    %739 = vrot.lane.b32.xlu0 %v732, 1
    %v740 = vpop.permute.xlu0 %739
    %741 = vrot.lane.b32.xlu0 %v733, 1
    %v742 = vpop.permute.xlu0 %741
    %v743 = vsel %vm221, %v738, %v740
    %v744 = vsel %vm221, %v740, %v742
    %v747 = vsel %vm87, %v743, 0.0
    %v748 = vsel %vm88, %v744, 0.0
    %749 = vst [vmem:[#allocation3 + $0x60] sm:$0xff] %v747
    %750 = vst [vmem:[#allocation3 + $0x68] sm:$0xff] %v748
    %v751 = vld [vmem:[#allocation2 + $0x20] sm:$0xff]
    %v752 = vld [vmem:[#allocation2 + $0x28] sm:$0xff]
    %v753 = vld [vmem:[#allocation2 + $0x30] sm:$0xff]
    %757 = vrot.lane.b32.xlu0 %v751, 1
    %v758 = vpop.permute.xlu0 %757
    %759 = vrot.lane.b32.xlu0 %v752, 1
    %v760 = vpop.permute.xlu0 %759
    %761 = vrot.lane.b32.xlu0 %v753, 1
    %v762 = vpop.permute.xlu0 %761
    %v763 = vsel %vm221, %v758, %v760
    %v764 = vsel %vm221, %v760, %v762
    %v767 = vsel %vm87, %v763, 0.0
    %v768 = vsel %vm88, %v764, 0.0
    %769 = vst [vmem:[#allocation3 + $0x70] sm:$0xff] %v767
    %770 = vst [vmem:[#allocation3 + $0x78] sm:$0xff] %v768
    %v771 = vld [vmem:[#allocation2 + $0x8] sm:$0xff]
    %v772 = vld [vmem:[#allocation2 + $0x10] sm:$0xff]
    %773 = vst [vmem:[#allocation3 + $0x80] sm:$0xff] %v771
    %774 = vst [vmem:[#allocation3 + $0x88] sm:$0xff] %v772
    %v775 = vld [vmem:[#allocation2 + $0x28] sm:$0xff]
    %v776 = vld [vmem:[#allocation2 + $0x30] sm:$0xff]
    %777 = vst [vmem:[#allocation3 + $0x90] sm:$0xff] %v775
    %778 = vst [vmem:[#allocation3 + $0x98] sm:$0xff] %v776
    %v779 = vld [vmem:[#allocation2 + $0x8] sm:$0xff]
    %v780 = vld [vmem:[#allocation2 + $0x10] sm:$0xff]
    %v781 = vld [vmem:[#allocation2 + $0x18] sm:$0xff]
    %785 = vrot.lane.b32.xlu0 %v779, 127
    %v786 = vpop.permute.xlu0 %785
    %787 = vrot.lane.b32.xlu0 %v780, 127
    %v788 = vpop.permute.xlu0 %787
    %789 = vrot.lane.b32.xlu0 %v781, 127
    %v790 = vpop.permute.xlu0 %789
    %v791 = vsel %vm270, %v786, %v788
    %v792 = vsel %vm270, %v788, %v790
    %v795 = vsel %vm169, %v791, 0.0
    %v796 = vsel %vm170, %v792, 0.0
    %797 = vst [vmem:[#allocation3 + $0xa0] sm:$0xff] %v795
    %798 = vst [vmem:[#allocation3 + $0xa8] sm:$0xff] %v796
    %v799 = vld [vmem:[#allocation2 + $0x28] sm:$0xff]
    %v800 = vld [vmem:[#allocation2 + $0x30] sm:$0xff]
    %v801 = vld [vmem:[#allocation2 + $0x38] sm:$0xff]
    %805 = vrot.lane.b32.xlu0 %v799, 127
    %v806 = vpop.permute.xlu0 %805
    %807 = vrot.lane.b32.xlu0 %v800, 127
    %v808 = vpop.permute.xlu0 %807
    %809 = vrot.lane.b32.xlu0 %v801, 127
    %v810 = vpop.permute.xlu0 %809
    %v811 = vsel %vm270, %v806, %v808
    %v812 = vsel %vm270, %v808, %v810
    %v815 = vsel %vm169, %v811, 0.0
    %v816 = vsel %vm170, %v812, 0.0
    %817 = vst [vmem:[#allocation3 + $0xb0] sm:$0xff] %v815
    %818 = vst [vmem:[#allocation3 + $0xb8] sm:$0xff] %v816
    %v819 = vld [vmem:[#allocation2 + $0x8] sm:$0xff]
    %v820 = vld [vmem:[#allocation2 + $0x10] sm:$0xff]
    %v821 = vld [vmem:[#allocation2 + $0x18] sm:$0xff]
    %825 = vrot.lane.b32.xlu0 %v819, 113
    %v826 = vpop.permute.xlu0 %825
    %827 = vrot.lane.b32.xlu0 %v820, 113
    %v828 = vpop.permute.xlu0 %827
    %829 = vrot.lane.b32.xlu0 %v821, 113
    %v830 = vpop.permute.xlu0 %829
    %v831 = vsel %vm311, %v826, %v828
    %v832 = vsel %vm311, %v828, %v830
    %v835 = vsel %vm87, %v831, 0.0
    %v836 = vsel %vm88, %v832, 0.0
    %837 = vst [vmem:[#allocation3 + $0xc0] sm:$0xff] %v835
    %838 = vst [vmem:[#allocation3 + $0xc8] sm:$0xff] %v836
    %v839 = vld [vmem:[#allocation2 + $0x28] sm:$0xff]
    %v840 = vld [vmem:[#allocation2 + $0x30] sm:$0xff]
    %v841 = vld [vmem:[#allocation2 + $0x38] sm:$0xff]
    %845 = vrot.lane.b32.xlu0 %v839, 113
    %v846 = vpop.permute.xlu0 %845
    %847 = vrot.lane.b32.xlu0 %v840, 113
    %v848 = vpop.permute.xlu0 %847
    %849 = vrot.lane.b32.xlu0 %v841, 113
    %v850 = vpop.permute.xlu0 %849
    %v851 = vsel %vm311, %v846, %v848
    %v852 = vsel %vm311, %v848, %v850
    %v855 = vsel %vm87, %v851, 0.0
    %v856 = vsel %vm88, %v852, 0.0
    %857 = vst [vmem:[#allocation3 + $0xd0] sm:$0xff] %v855
    %858 = vst [vmem:[#allocation3 + $0xd8] sm:$0xff] %v856
    %v859 = vld [vmem:[#allocation2 + $0x8] sm:$0xff]
    %v860 = vld [vmem:[#allocation2 + $0x10] sm:$0xff]
    %v861 = vld [vmem:[#allocation2 + $0x18] sm:$0xff]
    %865 = vrot.lane.b32.xlu0 %v859, 112
    %v866 = vpop.permute.xlu0 %865
    %867 = vrot.lane.b32.xlu0 %v860, 112
    %v868 = vpop.permute.xlu0 %867
    %869 = vrot.lane.b32.xlu0 %v861, 112
    %v870 = vpop.permute.xlu0 %869
    %v871 = vsel %vm352, %v866, %v868
    %v872 = vsel %vm352, %v868, %v870
    %875 = vst [vmem:[#allocation3 + $0xe0] sm:$0xff] %v871
    %876 = vst [vmem:[#allocation3 + $0xe8] sm:$0xff] %v872
    %v877 = vld [vmem:[#allocation2 + $0x28] sm:$0xff]
    %v878 = vld [vmem:[#allocation2 + $0x30] sm:$0xff]
    %v879 = vld [vmem:[#allocation2 + $0x38] sm:$0xff]
    %883 = vrot.lane.b32.xlu0 %v877, 112
    %v884 = vpop.permute.xlu0 %883
    %885 = vrot.lane.b32.xlu0 %v878, 112
    %v886 = vpop.permute.xlu0 %885
    %887 = vrot.lane.b32.xlu0 %v879, 112
    %v888 = vpop.permute.xlu0 %887
    %v889 = vsel %vm352, %v884, %v886
    %v890 = vsel %vm352, %v886, %v888
    %893 = vst [vmem:[#allocation3 + $0xf0] sm:$0xff] %v889
    %894 = vst [vmem:[#allocation3 + $0xf8] sm:$0xff] %v890
    %v895 = vld [vmem:[#allocation2 + $0x8] sm:$0xff]
    %v896 = vld [vmem:[#allocation2 + $0x10] sm:$0xff]
    %v897 = vld [vmem:[#allocation2 + $0x18] sm:$0xff]
    %901 = vrot.lane.b32.xlu0 %v895, 111
    %v902 = vpop.permute.xlu0 %901
    %903 = vrot.lane.b32.xlu0 %v896, 111
    %v904 = vpop.permute.xlu0 %903
    %905 = vrot.lane.b32.xlu0 %v897, 111
    %v906 = vpop.permute.xlu0 %905
    %v907 = vsel %vm389, %v902, %v904
    %v908 = vsel %vm389, %v904, %v906
    %v911 = vsel %vm169, %v907, 0.0
    %v912 = vsel %vm170, %v908, 0.0
    %913 = vst [vmem:[#allocation3 + $0x100] sm:$0xff] %v911
    %914 = vst [vmem:[#allocation3 + $0x108] sm:$0xff] %v912
    %v915 = vld [vmem:[#allocation2 + $0x28] sm:$0xff]
    %v916 = vld [vmem:[#allocation2 + $0x30] sm:$0xff]
    %v917 = vld [vmem:[#allocation2 + $0x38] sm:$0xff]
    %921 = vrot.lane.b32.xlu0 %v915, 111
    %v922 = vpop.permute.xlu0 %921
    %923 = vrot.lane.b32.xlu0 %v916, 111
    %v924 = vpop.permute.xlu0 %923
    %925 = vrot.lane.b32.xlu0 %v917, 111
    %v926 = vpop.permute.xlu0 %925
    %v927 = vsel %vm389, %v922, %v924
    %v928 = vsel %vm389, %v924, %v926
    %v931 = vsel %vm169, %v927, 0.0
    %v932 = vsel %vm170, %v928, 0.0
    %933 = vst [vmem:[#allocation3 + $0x110] sm:$0xff] %v931
    %934 = vst [vmem:[#allocation3 + $0x118] sm:$0xff] %v932
    %s935 = scalar_lea.vmem %s1, 8
    %v936 = vld [vmem:[%s935] sm:$0xff]
    %v937 = vld [vmem:[#allocation3] sm:$0xff]
    %v938 = vld [vmem:[#allocation3 + $0x8] sm:$0xff]
    %v939 = vld [vmem:[#allocation3 + $0x10] sm:$0xff]
    %v940 = vld [vmem:[#allocation3 + $0x18] sm:$0xff]
    %v941 = vld [vmem:[#allocation3 + $0x20] sm:$0xff]
    %v942 = vld [vmem:[#allocation3 + $0x28] sm:$0xff]
    %v943 = vld [vmem:[#allocation3 + $0x30] sm:$0xff]
    %v944 = vld [vmem:[#allocation3 + $0x38] sm:$0xff]
    %v945 = vld [vmem:[#allocation3 + $0x40] sm:$0xff]
    %v946 = vld [vmem:[#allocation3 + $0x48] sm:$0xff]
    %v947 = vld [vmem:[#allocation3 + $0x50] sm:$0xff]
    %v948 = vld [vmem:[#allocation3 + $0x58] sm:$0xff]
    %v949 = vld [vmem:[#allocation3 + $0x60] sm:$0xff]
    %v950 = vld [vmem:[#allocation3 + $0x68] sm:$0xff]
    %v951 = vld [vmem:[#allocation3 + $0x70] sm:$0xff]
    %v952 = vld [vmem:[#allocation3 + $0x78] sm:$0xff]
    %v953 = vld [vmem:[#allocation3 + $0x80] sm:$0xff]
    %v954 = vld [vmem:[#allocation3 + $0x88] sm:$0xff]
    %v955 = vld [vmem:[#allocation3 + $0x90] sm:$0xff]
    %v956 = vld [vmem:[#allocation3 + $0x98] sm:$0xff]
    %v957 = vld [vmem:[#allocation3 + $0xa0] sm:$0xff]
    %v958 = vld [vmem:[#allocation3 + $0xa8] sm:$0xff]
    %v959 = vld [vmem:[#allocation3 + $0xb0] sm:$0xff]
    %v960 = vld [vmem:[#allocation3 + $0xb8] sm:$0xff]
    %v961 = vld [vmem:[#allocation3 + $0xc0] sm:$0xff]
    %v962 = vld [vmem:[#allocation3 + $0xc8] sm:$0xff]
    %v963 = vld [vmem:[#allocation3 + $0xd0] sm:$0xff]
    %v964 = vld [vmem:[#allocation3 + $0xd8] sm:$0xff]
    %v965 = vld [vmem:[#allocation3 + $0xe0] sm:$0xff]
    %v966 = vld [vmem:[#allocation3 + $0xe8] sm:$0xff]
    %v967 = vld [vmem:[#allocation3 + $0xf0] sm:$0xff]
    %v968 = vld [vmem:[#allocation3 + $0xf8] sm:$0xff]
    %v969 = vld [vmem:[#allocation3 + $0x100] sm:$0xff]
    %v970 = vld [vmem:[#allocation3 + $0x108] sm:$0xff]
    %v971 = vld [vmem:[#allocation3 + $0x110] sm:$0xff]
    %v972 = vld [vmem:[#allocation3 + $0x118] sm:$0xff]
    %s973 = scalar_lea.vmem %s2, 8
    %v974 = vld [vmem:[%s973] sm:$0xff]
    %976 = vset.pattern.permute.xlu0 0
    %977 = vperm.xlu0 %976, %v974
    %v978 = vpop.permute.xlu0 %977
    %v981 = vsel %vm461, %v936, 0
    %983 = vmatprep.subr.mxu0 0.0
    %984 = vmatpush1.msra.mxu0 0.0
    %985 = vmatprep.subr.mxu0 0.0
    %986 = vmatpush1.msra.mxu0 0.0
    %987 = vmatprep.subr.mxu0 0.0
    %988 = vmatpush1.msra.mxu0 0.0
    %989 = vmatprep.subr.mxu0 0.0
    %990 = vmatpush1.msra.mxu0 0.0
    %991 = vmatprep.subr.mxu0 0.0
    %992 = vmatpush1.msra.mxu0 0.0
    %993 = vmatprep.subr.mxu0 0.0
    %994 = vmatpush1.msra.mxu0 0.0
    %995 = vmatprep.subr.mxu0 0.0
    %996 = vmatpush1.msra.mxu0 0.0
    %997 = vmatprep.subr.mxu0 %v970
    %998 = vmatpush1.msra.mxu0 %v969
    %999 = vmatprep.subr.mxu0 %v966
    %1000 = vmatpush1.msra.mxu0 %v965
    %1001 = vmatprep.subr.mxu0 %v962
    %1002 = vmatpush1.msra.mxu0 %v961
    %1003 = vmatprep.subr.mxu0 %v958
    %1004 = vmatpush1.msra.mxu0 %v957
    %1005 = vmatprep.subr.mxu0 %v954
    %1006 = vmatpush1.msra.mxu0 %v953
    %1007 = vmatprep.subr.mxu0 %v950
    %1008 = vmatpush1.msra.mxu0 %v949
    %1009 = vmatprep.subr.mxu0 %v946
    %1010 = vmatpush1.msra.mxu0 %v945
    %1011 = vmatprep.subr.mxu0 %v942
    %1012 = vmatpush1.msra.mxu0 %v941
    %1013 = vmatprep.subr.mxu0 %v938
    %1014 = vmatpush1.msra.mxu0 %v937
    %1015 = vmatprep.subr.mxu0 0.0
    %1016 = vmatpush2.msra.mxu0 0.0
    %1017 = vmatprep.subr.mxu0 0.0
    %1018 = vmatpush2.msra.mxu0 0.0
    %1019 = vmatprep.subr.mxu0 0.0
    %1020 = vmatpush2.msra.mxu0 0.0
    %1021 = vmatprep.subr.mxu0 0.0
    %1022 = vmatpush2.msra.mxu0 0.0
    %1023 = vmatprep.subr.mxu0 0.0
    %1024 = vmatpush2.msra.mxu0 0.0
    %1025 = vmatprep.subr.mxu0 0.0
    %1026 = vmatpush2.msra.mxu0 0.0
    %1027 = vmatprep.subr.mxu0 0.0
    %1028 = vmatpush2.msra.mxu0 0.0
    %1029 = vmatprep.subr.mxu0 0.0
    %1030 = vmatpush2.msra.mxu0 0.0
    %1031 = vmatprep.subr.mxu0 0.0
    %1032 = vmatpush2.msra.mxu0 0.0
    %1033 = vmatprep.subr.mxu0 0.0
    %1034 = vmatpush2.msra.mxu0 0.0
    %1035 = vmatprep.subr.mxu0 0.0
    %1036 = vmatpush2.msra.mxu0 0.0
    %1037 = vmatprep.subr.mxu0 0.0
    %1038 = vmatpush2.msra.mxu0 0.0
    %1039 = vmatprep.subr.mxu0 0.0
    %1040 = vmatpush2.msra.mxu0 0.0
    %1041 = vmatprep.subr.mxu0 0.0
    %1042 = vmatpush2.msra.mxu0 0.0
    %1043 = vmatprep.subr.mxu0 0.0
    %1044 = vmatpush2.msra.mxu0 0.0
    %1045 = vmatprep.subr.mxu0 0.0
    %1046 = vmatpush2.msra.mxu0 0.0
    %1047 = vmatprep.mubr.f32.mxu0 0.0
    %1048 = vmatmul.mubr.f32.gmra.mxu0 %v981
    %v1049 = vpop.f32.mrf.mxu0
    %v1050 = vadd.f32 %v978, %v1049
    %v1051 = vpop.f32.mrf.mxu0
    %v1052 = vadd.f32 %v978, %v1051
    %1053 = vdwg.mxu0
    %1054 = vmatprep.subr.mxu0 0.0
    %1055 = vmatpush1.msra.mxu0 0.0
    %1056 = vmatprep.subr.mxu0 0.0
    %1057 = vmatpush1.msra.mxu0 0.0
    %1058 = vmatprep.subr.mxu0 0.0
    %1059 = vmatpush1.msra.mxu0 0.0
    %1060 = vmatprep.subr.mxu0 0.0
    %1061 = vmatpush1.msra.mxu0 0.0
    %1062 = vmatprep.subr.mxu0 0.0
    %1063 = vmatpush1.msra.mxu0 0.0
    %1064 = vmatprep.subr.mxu0 0.0
    %1065 = vmatpush1.msra.mxu0 0.0
    %1066 = vmatprep.subr.mxu0 0.0
    %1067 = vmatpush1.msra.mxu0 0.0
    %1068 = vmatprep.subr.mxu0 %v972
    %1069 = vmatpush1.msra.mxu0 %v971
    %1070 = vmatprep.subr.mxu0 %v968
    %1071 = vmatpush1.msra.mxu0 %v967
    %1072 = vmatprep.subr.mxu0 %v964
    %1073 = vmatpush1.msra.mxu0 %v963
    %1074 = vmatprep.subr.mxu0 %v960
    %1075 = vmatpush1.msra.mxu0 %v959
    %1076 = vmatprep.subr.mxu0 %v956
    %1077 = vmatpush1.msra.mxu0 %v955
    %1078 = vmatprep.subr.mxu0 %v952
    %1079 = vmatpush1.msra.mxu0 %v951
    %1080 = vmatprep.subr.mxu0 %v948
    %1081 = vmatpush1.msra.mxu0 %v947
    %1082 = vmatprep.subr.mxu0 %v944
    %1083 = vmatpush1.msra.mxu0 %v943
    %1084 = vmatprep.subr.mxu0 %v940
    %1085 = vmatpush1.msra.mxu0 %v939
    %1086 = vmatprep.subr.mxu0 0.0
    %1087 = vmatpush2.msra.mxu0 0.0
    %1088 = vmatprep.subr.mxu0 0.0
    %1089 = vmatpush2.msra.mxu0 0.0
    %1090 = vmatprep.subr.mxu0 0.0
    %1091 = vmatpush2.msra.mxu0 0.0
    %1092 = vmatprep.subr.mxu0 0.0
    %1093 = vmatpush2.msra.mxu0 0.0
    %1094 = vmatprep.subr.mxu0 0.0
    %1095 = vmatpush2.msra.mxu0 0.0
    %1096 = vmatprep.subr.mxu0 0.0
    %1097 = vmatpush2.msra.mxu0 0.0
    %1098 = vmatprep.subr.mxu0 0.0
    %1099 = vmatpush2.msra.mxu0 0.0
    %1100 = vmatprep.subr.mxu0 0.0
    %1101 = vmatpush2.msra.mxu0 0.0
    %1102 = vmatprep.subr.mxu0 0.0
    %1103 = vmatpush2.msra.mxu0 0.0
    %1104 = vmatprep.subr.mxu0 0.0
    %1105 = vmatpush2.msra.mxu0 0.0
    %1106 = vmatprep.subr.mxu0 0.0
    %1107 = vmatpush2.msra.mxu0 0.0
    %1108 = vmatprep.subr.mxu0 0.0
    %1109 = vmatpush2.msra.mxu0 0.0
    %1110 = vmatprep.subr.mxu0 0.0
    %1111 = vmatpush2.msra.mxu0 0.0
    %1112 = vmatprep.subr.mxu0 0.0
    %1113 = vmatpush2.msra.mxu0 0.0
    %1114 = vmatprep.subr.mxu0 0.0
    %1115 = vmatpush2.msra.mxu0 0.0
    %1116 = vmatprep.subr.mxu0 0.0
    %1117 = vmatpush2.msra.mxu0 0.0
    %1118 = vmatprep.mubr.f32.mxu0 0.0
    %1119 = vmatmul.mubr.f32.gmra.mxu0 %v981
    %v1120 = vpop.f32.mrf.mxu0
    %v1121 = vadd.f32 %v978, %v1120
    %v1122 = vpop.f32.mrf.mxu0
    %v1123 = vadd.f32 %v978, %v1122
    %1124 = vdwg.mxu0
    %v1125 = vmax.f32 %v1050, 0.0
    %v1126 = vmax.f32 %v1052, 0.0
    %v1127 = vmax.f32 %v1121, 0.0
    %v1128 = vmax.f32 %v1123, 0.0
    %1129 = vst [vmem:[#allocation2 + $0x8] sm:$0xff] %v1125
    %1130 = vst [vmem:[#allocation2 + $0x10] sm:$0xff] %v1126
    %1131 = vst [vmem:[#allocation2 + $0x28] sm:$0xff] %v1127
    %1132 = vst [vmem:[#allocation2 + $0x30] sm:$0xff] %v1128
    %v1133 = vld [vmem:[#allocation2 + $0x8] sm:$0xff]
    %v1134 = vld [vmem:[#allocation2 + $0x10] sm:$0xff]
    %v1135 = vld [vmem:[#allocation2 + $0x18] sm:$0xff]
    %1139 = vrot.lane.b32.xlu0 %v1133, 127
    %v1140 = vpop.permute.xlu0 %1139
    %1141 = vrot.lane.b32.xlu0 %v1134, 127
    %v1142 = vpop.permute.xlu0 %1141
    %1143 = vrot.lane.b32.xlu0 %v1135, 127
    %v1144 = vpop.permute.xlu0 %1143
    %v1145 = vsel %vm270, %v1140, %v1142
    %v1146 = vsel %vm270, %v1142, %v1144
    %v1149 = vmax.f32 %v1133, %v1145
    %v1150 = vmax.f32 %v1134, %v1146
    %1151 = vrot.lane.b32.xlu0 %v1133, 112
    %v1152 = vpop.permute.xlu0 %1151
    %1153 = vrot.lane.b32.xlu0 %v1134, 112
    %v1154 = vpop.permute.xlu0 %1153
    %1155 = vrot.lane.b32.xlu0 %v1135, 112
    %v1156 = vpop.permute.xlu0 %1155
    %v1157 = vsel %vm352, %v1152, %v1154
    %v1158 = vsel %vm352, %v1154, %v1156
    %v1161 = vmax.f32 %v1149, %v1157
    %v1162 = vmax.f32 %v1150, %v1158
    %1163 = vrot.lane.b32.xlu0 %v1133, 111
    %v1164 = vpop.permute.xlu0 %1163
    %1165 = vrot.lane.b32.xlu0 %v1134, 111
    %v1166 = vpop.permute.xlu0 %1165
    %1167 = vrot.lane.b32.xlu0 %v1135, 111
    %v1168 = vpop.permute.xlu0 %1167
    %v1169 = vsel %vm389, %v1164, %v1166
    %v1170 = vsel %vm389, %v1166, %v1168
    %v1173 = vmax.f32 %v1161, %v1169
    %v1174 = vmax.f32 %v1162, %v1170
    %v1175 = vld [vmem:[%s3] sm:$0xff]
    %v1176 = vld [vmem:[%s3 + $0x8] sm:$0xff]
    %v1177 = vld [vmem:[%s3 + $0x10] sm:$0xff]
    %v1178 = vld [vmem:[%s3 + $0x18] sm:$0xff]
    %v1179 = vld [vmem:[%s3 + $0x20] sm:$0xff]
    %v1180 = vld [vmem:[%s3 + $0x28] sm:$0xff]
    %v1181 = vld [vmem:[%s3 + $0x30] sm:$0xff]
    %v1182 = vld [vmem:[%s3 + $0x38] sm:$0xff]
    %v1183 = vld [vmem:[%s3 + $0x40] sm:$0xff]
    %v1184 = vld [vmem:[%s3 + $0x48] sm:$0xff]
    %v1185 = vld [vmem:[%s3 + $0x50] sm:$0xff]
    %v1186 = vld [vmem:[%s3 + $0x58] sm:$0xff]
    %v1187 = vld [vmem:[%s3 + $0x60] sm:$0xff]
    %v1188 = vld [vmem:[%s3 + $0x68] sm:$0xff]
    %v1189 = vld [vmem:[%s3 + $0x70] sm:$0xff]
    %v1190 = vld [vmem:[%s3 + $0x78] sm:$0xff]
    %v1191 = vld [vmem:[%s3 + $0x80] sm:$0xff]
    %v1192 = vld [vmem:[%s3 + $0x88] sm:$0xff]
    %v1193 = vld [vmem:[%s3 + $0x90] sm:$0xff]
    %v1194 = vld [vmem:[%s3 + $0x98] sm:$0xff]
    %v1195 = vld [vmem:[%s3 + $0xa0] sm:$0xff]
    %v1196 = vld [vmem:[%s3 + $0xa8] sm:$0xff]
    %v1197 = vld [vmem:[%s3 + $0xb0] sm:$0xff]
    %v1198 = vld [vmem:[%s3 + $0xb8] sm:$0xff]
    %v1199 = vld [vmem:[%s3 + $0xc0] sm:$0xff]
    %v1200 = vld [vmem:[%s3 + $0xc8] sm:$0xff]
    %v1201 = vld [vmem:[%s3 + $0xd0] sm:$0xff]
    %v1202 = vld [vmem:[%s3 + $0xd8] sm:$0xff]
    %v1203 = vld [vmem:[%s3 + $0xe0] sm:$0xff]
    %v1204 = vld [vmem:[%s3 + $0xe8] sm:$0xff]
    %v1205 = vld [vmem:[%s3 + $0xf0] sm:$0xff]
    %v1206 = vld [vmem:[%s3 + $0xf8] sm:$0xff]
    %1207 = vmatprep.subr.mxu0 0.0
    %1208 = vmatpush1.msra.mxu0 %v1190
    %1209 = vmatprep.subr.mxu0 0.0
    %1210 = vmatpush1.msra.mxu0 %v1189
    %1211 = vmatprep.subr.mxu0 0.0
    %1212 = vmatpush1.msra.mxu0 %v1188
    %1213 = vmatprep.subr.mxu0 0.0
    %1214 = vmatpush1.msra.mxu0 %v1187
    %1215 = vmatprep.subr.mxu0 0.0
    %1216 = vmatpush1.msra.mxu0 %v1186
    %1217 = vmatprep.subr.mxu0 0.0
    %1218 = vmatpush1.msra.mxu0 %v1185
    %1219 = vmatprep.subr.mxu0 0.0
    %1220 = vmatpush1.msra.mxu0 %v1184
    %1221 = vmatprep.subr.mxu0 0.0
    %1222 = vmatpush1.msra.mxu0 %v1183
    %1223 = vmatprep.subr.mxu0 0.0
    %1224 = vmatpush1.msra.mxu0 %v1182
    %1225 = vmatprep.subr.mxu0 0.0
    %1226 = vmatpush1.msra.mxu0 %v1181
    %1227 = vmatprep.subr.mxu0 0.0
    %1228 = vmatpush1.msra.mxu0 %v1180
    %1229 = vmatprep.subr.mxu0 0.0
    %1230 = vmatpush1.msra.mxu0 %v1179
    %1231 = vmatprep.subr.mxu0 0.0
    %1232 = vmatpush1.msra.mxu0 %v1178
    %1233 = vmatprep.subr.mxu0 0.0
    %1234 = vmatpush1.msra.mxu0 %v1177
    %1235 = vmatprep.subr.mxu0 0.0
    %1236 = vmatpush1.msra.mxu0 %v1176
    %1237 = vmatprep.subr.mxu0 0.0
    %1238 = vmatpush1.msra.mxu0 %v1175
    %1239 = vmatprep.subr.mxu0 0.0
    %1240 = vmatpush2.msra.mxu0 %v1206
    %1241 = vmatprep.subr.mxu0 0.0
    %1242 = vmatpush2.msra.mxu0 %v1205
    %1243 = vmatprep.subr.mxu0 0.0
    %1244 = vmatpush2.msra.mxu0 %v1204
    %1245 = vmatprep.subr.mxu0 0.0
    %1246 = vmatpush2.msra.mxu0 %v1203
    %1247 = vmatprep.subr.mxu0 0.0
    %1248 = vmatpush2.msra.mxu0 %v1202
    %1249 = vmatprep.subr.mxu0 0.0
    %1250 = vmatpush2.msra.mxu0 %v1201
    %1251 = vmatprep.subr.mxu0 0.0
    %1252 = vmatpush2.msra.mxu0 %v1200
    %1253 = vmatprep.subr.mxu0 0.0
    %1254 = vmatpush2.msra.mxu0 %v1199
    %1255 = vmatprep.subr.mxu0 0.0
    %1256 = vmatpush2.msra.mxu0 %v1198
    %1257 = vmatprep.subr.mxu0 0.0
    %1258 = vmatpush2.msra.mxu0 %v1197
    %1259 = vmatprep.subr.mxu0 0.0
    %1260 = vmatpush2.msra.mxu0 %v1196
    %1261 = vmatprep.subr.mxu0 0.0
    %1262 = vmatpush2.msra.mxu0 %v1195
    %1263 = vmatprep.subr.mxu0 0.0
    %1264 = vmatpush2.msra.mxu0 %v1194
    %1265 = vmatprep.subr.mxu0 0.0
    %1266 = vmatpush2.msra.mxu0 %v1193
    %1267 = vmatprep.subr.mxu0 0.0
    %1268 = vmatpush2.msra.mxu0 %v1192
    %1269 = vmatprep.subr.mxu0 0.0
    %1270 = vmatpush2.msra.mxu0 %v1191
    %1271 = vmatprep.mubr.f32.mxu0 %v1174
    %1272 = vmatmul.mubr.f32.gmra.mxu0 %v1173
    %v1273 = vpop.f32.mrf.mxu0
    %v1274 = vadd.f32 0.0, %v1273
    %v1275 = vpop.f32.mrf.mxu0
    %1276 = vdwg.mxu0
    %vm1277 = vcmask 523264
    %1278 = vst.msk [vmem:[#allocation4] sm:$0xff] %vm1277, %v1274
    %v1279 = vld [vmem:[#allocation2 + $0x28] sm:$0xff]
    %v1280 = vld [vmem:[#allocation2 + $0x30] sm:$0xff]
    %v1281 = vld [vmem:[#allocation2 + $0x28] sm:$0xff]
    %v1282 = vld [vmem:[#allocation2 + $0x30] sm:$0xff]
    %v1283 = vld [vmem:[#allocation2 + $0x38] sm:$0xff]
    %1287 = vrot.lane.b32.xlu0 %v1281, 127
    %v1288 = vpop.permute.xlu0 %1287
    %1289 = vrot.lane.b32.xlu0 %v1282, 127
    %v1290 = vpop.permute.xlu0 %1289
    %1291 = vrot.lane.b32.xlu0 %v1283, 127
    %v1292 = vpop.permute.xlu0 %1291
    %v1293 = vsel %vm270, %v1288, %v1290
    %v1294 = vsel %vm270, %v1290, %v1292
    %v1297 = vmax.f32 %v1279, %v1293
    %v1298 = vmax.f32 %v1280, %v1294
    %1299 = vrot.lane.b32.xlu0 %v1281, 112
    %v1300 = vpop.permute.xlu0 %1299
    %1301 = vrot.lane.b32.xlu0 %v1282, 112
    %v1302 = vpop.permute.xlu0 %1301
    %1303 = vrot.lane.b32.xlu0 %v1283, 112
    %v1304 = vpop.permute.xlu0 %1303
    %v1305 = vsel %vm352, %v1300, %v1302
    %v1306 = vsel %vm352, %v1302, %v1304
    %v1309 = vmax.f32 %v1297, %v1305
    %v1310 = vmax.f32 %v1298, %v1306
    %1311 = vrot.lane.b32.xlu0 %v1281, 111
    %v1312 = vpop.permute.xlu0 %1311
    %1313 = vrot.lane.b32.xlu0 %v1282, 111
    %v1314 = vpop.permute.xlu0 %1313
    %1315 = vrot.lane.b32.xlu0 %v1283, 111
    %v1316 = vpop.permute.xlu0 %1315
    %v1317 = vsel %vm389, %v1312, %v1314
    %v1318 = vsel %vm389, %v1314, %v1316
    %v1321 = vmax.f32 %v1309, %v1317
    %v1322 = vmax.f32 %v1310, %v1318
    %v1323 = vld [vmem:[%s3] sm:$0xff]
    %v1324 = vld [vmem:[%s3 + $0x8] sm:$0xff]
    %v1325 = vld [vmem:[%s3 + $0x10] sm:$0xff]
    %v1326 = vld [vmem:[%s3 + $0x18] sm:$0xff]
    %v1327 = vld [vmem:[%s3 + $0x20] sm:$0xff]
    %v1328 = vld [vmem:[%s3 + $0x28] sm:$0xff]
    %v1329 = vld [vmem:[%s3 + $0x30] sm:$0xff]
    %v1330 = vld [vmem:[%s3 + $0x38] sm:$0xff]
    %v1331 = vld [vmem:[%s3 + $0x40] sm:$0xff]
    %v1332 = vld [vmem:[%s3 + $0x48] sm:$0xff]
    %v1333 = vld [vmem:[%s3 + $0x50] sm:$0xff]
    %v1334 = vld [vmem:[%s3 + $0x58] sm:$0xff]
    %v1335 = vld [vmem:[%s3 + $0x60] sm:$0xff]
    %v1336 = vld [vmem:[%s3 + $0x68] sm:$0xff]
    %v1337 = vld [vmem:[%s3 + $0x70] sm:$0xff]
    %v1338 = vld [vmem:[%s3 + $0x78] sm:$0xff]
    %v1339 = vld [vmem:[%s3 + $0x80] sm:$0xff]
    %v1340 = vld [vmem:[%s3 + $0x88] sm:$0xff]
    %v1341 = vld [vmem:[%s3 + $0x90] sm:$0xff]
    %v1342 = vld [vmem:[%s3 + $0x98] sm:$0xff]
    %v1343 = vld [vmem:[%s3 + $0xa0] sm:$0xff]
    %v1344 = vld [vmem:[%s3 + $0xa8] sm:$0xff]
    %v1345 = vld [vmem:[%s3 + $0xb0] sm:$0xff]
    %v1346 = vld [vmem:[%s3 + $0xb8] sm:$0xff]
    %v1347 = vld [vmem:[%s3 + $0xc0] sm:$0xff]
    %v1348 = vld [vmem:[%s3 + $0xc8] sm:$0xff]
    %v1349 = vld [vmem:[%s3 + $0xd0] sm:$0xff]
    %v1350 = vld [vmem:[%s3 + $0xd8] sm:$0xff]
    %v1351 = vld [vmem:[%s3 + $0xe0] sm:$0xff]
    %v1352 = vld [vmem:[%s3 + $0xe8] sm:$0xff]
    %v1353 = vld [vmem:[%s3 + $0xf0] sm:$0xff]
    %v1354 = vld [vmem:[%s3 + $0xf8] sm:$0xff]
    %1355 = vmatprep.subr.mxu0 0.0
    %1356 = vmatpush1.msra.mxu0 %v1338
    %1357 = vmatprep.subr.mxu0 0.0
    %1358 = vmatpush1.msra.mxu0 %v1337
    %1359 = vmatprep.subr.mxu0 0.0
    %1360 = vmatpush1.msra.mxu0 %v1336
    %1361 = vmatprep.subr.mxu0 0.0
    %1362 = vmatpush1.msra.mxu0 %v1335
    %1363 = vmatprep.subr.mxu0 0.0
    %1364 = vmatpush1.msra.mxu0 %v1334
    %1365 = vmatprep.subr.mxu0 0.0
    %1366 = vmatpush1.msra.mxu0 %v1333
    %1367 = vmatprep.subr.mxu0 0.0
    %1368 = vmatpush1.msra.mxu0 %v1332
    %1369 = vmatprep.subr.mxu0 0.0
    %1370 = vmatpush1.msra.mxu0 %v1331
    %1371 = vmatprep.subr.mxu0 0.0
    %1372 = vmatpush1.msra.mxu0 %v1330
    %1373 = vmatprep.subr.mxu0 0.0
    %1374 = vmatpush1.msra.mxu0 %v1329
    %1375 = vmatprep.subr.mxu0 0.0
    %1376 = vmatpush1.msra.mxu0 %v1328
    %1377 = vmatprep.subr.mxu0 0.0
    %1378 = vmatpush1.msra.mxu0 %v1327
    %1379 = vmatprep.subr.mxu0 0.0
    %1380 = vmatpush1.msra.mxu0 %v1326
    %1381 = vmatprep.subr.mxu0 0.0
    %1382 = vmatpush1.msra.mxu0 %v1325
    %1383 = vmatprep.subr.mxu0 0.0
    %1384 = vmatpush1.msra.mxu0 %v1324
    %1385 = vmatprep.subr.mxu0 0.0
    %1386 = vmatpush1.msra.mxu0 %v1323
    %1387 = vmatprep.subr.mxu0 0.0
    %1388 = vmatpush2.msra.mxu0 %v1354
    %1389 = vmatprep.subr.mxu0 0.0
    %1390 = vmatpush2.msra.mxu0 %v1353
    %1391 = vmatprep.subr.mxu0 0.0
    %1392 = vmatpush2.msra.mxu0 %v1352
    %1393 = vmatprep.subr.mxu0 0.0
    %1394 = vmatpush2.msra.mxu0 %v1351
    %1395 = vmatprep.subr.mxu0 0.0
    %1396 = vmatpush2.msra.mxu0 %v1350
    %1397 = vmatprep.subr.mxu0 0.0
    %1398 = vmatpush2.msra.mxu0 %v1349
    %1399 = vmatprep.subr.mxu0 0.0
    %1400 = vmatpush2.msra.mxu0 %v1348
    %1401 = vmatprep.subr.mxu0 0.0
    %1402 = vmatpush2.msra.mxu0 %v1347
    %1403 = vmatprep.subr.mxu0 0.0
    %1404 = vmatpush2.msra.mxu0 %v1346
    %1405 = vmatprep.subr.mxu0 0.0
    %1406 = vmatpush2.msra.mxu0 %v1345
    %1407 = vmatprep.subr.mxu0 0.0
    %1408 = vmatpush2.msra.mxu0 %v1344
    %1409 = vmatprep.subr.mxu0 0.0
    %1410 = vmatpush2.msra.mxu0 %v1343
    %1411 = vmatprep.subr.mxu0 0.0
    %1412 = vmatpush2.msra.mxu0 %v1342
    %1413 = vmatprep.subr.mxu0 0.0
    %1414 = vmatpush2.msra.mxu0 %v1341
    %1415 = vmatprep.subr.mxu0 0.0
    %1416 = vmatpush2.msra.mxu0 %v1340
    %1417 = vmatprep.subr.mxu0 0.0
    %1418 = vmatpush2.msra.mxu0 %v1339
    %1419 = vmatprep.mubr.f32.mxu0 %v1322
    %1420 = vmatmul.mubr.f32.gmra.mxu0 %v1321
    %v1421 = vpop.f32.mrf.mxu0
    %v1422 = vadd.f32 0.0, %v1421
    %v1423 = vpop.f32.mrf.mxu0
    %1424 = vdwg.mxu0
    %1426 = vrot.lane.b32.xlu0 %v1422, 64
    %v1427 = vpop.permute.xlu0 %1426
    %vm1429 = vcmask 1048064
    %1430 = vst.msk [vmem:[#allocation4] sm:$0xff] %vm1429, %v1427
    // Predicated region
    $region18: #{tpu_custom_call.1} parent=1 // pred_check
      _
    $region19: #{tpu_custom_call.1} parent=1 // pred_check_branch
      %1432 = sbr.rel (0) target = $region21
    $region20: #{tpu_custom_call.1} parent=1 // pred_region
      %s1434 = ssub.s32 128, 128
      %1435 = vsyncadd [#allocation5], %s1434
      %s1437 = sshll.u32 [#allocation4], 4
      %s1438 = int_to_ptr.vmem [resolvable:$true] %s1437
      %1440 = dma.vmem_to_hbm [thread:$0]  %s1438, 128, %s4, [#allocation5]
    $region21: #{tpu_custom_call.1} parent=1 // pred_fallthru
      _
    // Predicated region
    $region22: #{tpu_custom_call.1} parent=1 // pred_check
      _
    $region23: #{tpu_custom_call.1} parent=1 // pred_check_branch
      %1442 = sbr.rel (0) target = $region25
    $region24: #{tpu_custom_call.1} parent=1 // pred_region
      %1443 = dma.done [#allocation5], 128
    $region25: #{tpu_custom_call.1} parent=1 // pred_fallthru
      _
    %1444 = vsyncpa [#allocation5], 1

</llo_original>
